<compile_context>
chip_gen: v5e
topology: v5e:2x2
jax: 0.10.0
libtpu: 0.0.40
codegen_flags: <defaults>
</compile_context>

<pallas_src>
import functools
import math

import jax
import jax.numpy as jnp
from jax import lax
from jax.experimental import pallas as pl
from jax.experimental.pallas import tpu as pltpu


# contract the last dims of both operands (A @ B.T) without materializing B.T
_NT = (((1,), (1,)), ((), ()))


def _choose_block_batch(B, S, *, min_grid=2, target_rows=256):
    """Largest divisor Bt of B with Bt*S <= target_rows rows per grid step,
    keeping at least `min_grid` grid steps when B >= min_grid (v7x: 2 TCs)."""
    if B <= 1:
        return 1
    best = 1
    for bt in range(1, B + 1):
        if B % bt:
            continue
        if B // bt < min_grid:
            continue
        if bt * S > target_rows:
            continue
        best = max(best, bt)
    return best


def _attention_core(q_full, k_full, v_full, adj_ref, wo_ref, o_ref, *,
                    head_size, attn_size, block_b):
    """Shared body: per-batch / per-head attention + single output projection.

    q_full/k_full/v_full: bf16 [block_b*S, HQ] (q already scaled).
    """
    f32, bf16 = jnp.float32, jnp.bfloat16
    S = o_ref.shape[1]

    ctx_rows = []
    for b in range(block_b):                       # statically unrolled
        adj = adj_ref[b if adj_ref.shape[0] > 1 else 0].astype(f32)   # [S, S]
        r0 = b * S
        heads = []
        for h in range(head_size):                 # statically unrolled
            lo = h * attn_size
            qh = q_full[r0:r0 + S, lo:lo + attn_size]                 # [S, a] bf16
            kh = k_full[r0:r0 + S, lo:lo + attn_size]
            vh = v_full[r0:r0 + S, lo:lo + attn_size]

            s = adj * lax.dot_general(qh, kh, _NT,
                                      preferred_element_type=f32)     # [S, S] f32
            m = jnp.max(s, axis=-1, keepdims=True)
            e = jnp.exp(s - m)
            denom = jnp.sum(e, axis=-1, keepdims=True)
            p = (e * pl.reciprocal(denom, approx=True)).astype(bf16)  # EUP rcp
            # attn dropout: identity in eval mode.

            heads.append(jnp.dot(p, vh, preferred_element_type=f32))  # [S, a]
        ctx_rows.append(jnp.concatenate(heads, axis=-1))               # [S, HQ]

    ctx = jnp.concatenate(ctx_rows, axis=0).astype(bf16)               # [rows, HQ]
    # Single output projection for all heads / all folded batches (K = HQ).
    out = jnp.dot(ctx, wo_ref[...], preferred_element_type=f32)        # [rows, Hpad]
    o_ref[...] = out.reshape(o_ref.shape).astype(o_ref.dtype)


def _mha_self_kernel(x_ref, adj_ref, wqkv_ref, wo_ref, o_ref, *,
                     head_size, attn_size, block_b, scale):
    """Self-attention path: one fused QKV projection per grid step."""
    f32, bf16 = jnp.float32, jnp.bfloat16
    HQ = head_size * attn_size
    rows = block_b * x_ref.shape[1]
    x = x_ref[...].reshape(rows, x_ref.shape[2])                       # bf16 [rows, Hin]

    qkv = lax.dot_general(x, wqkv_ref[...], _NT,
                          preferred_element_type=f32)                  # [rows, 3HQ]
    q_full = (qkv[:, :HQ] * scale).astype(bf16)
    k_full = qkv[:, HQ:2 * HQ].astype(bf16)
    v_full = qkv[:, 2 * HQ:].astype(bf16)

    _attention_core(q_full, k_full, v_full, adj_ref, wo_ref, o_ref,
                    head_size=head_size, attn_size=attn_size, block_b=block_b)


def _mha_kernel(q_ref, k_ref, v_ref, adj_ref, wq_ref, wk_ref, wv_ref, wo_ref,
                o_ref, *, head_size, attn_size, block_b, scale):
    """General (cross-attention) path: three projections per grid step."""
    f32, bf16 = jnp.float32, jnp.bfloat16
    rows = block_b * q_ref.shape[1]
    Hin = q_ref.shape[2]
    xq = q_ref[...].reshape(rows, Hin)
    xk = k_ref[...].reshape(rows, Hin)
    xv = v_ref[...].reshape(rows, Hin)

    q_full = (lax.dot_general(xq, wq_ref[...], _NT,
                              preferred_element_type=f32) * scale).astype(bf16)
    k_full = lax.dot_general(xk, wk_ref[...], _NT,
                             preferred_element_type=f32).astype(bf16)
    v_full = lax.dot_general(xv, wv_ref[...], _NT,
                             preferred_element_type=f32).astype(bf16)

    _attention_core(q_full, k_full, v_full, adj_ref, wo_ref, o_ref,
                    head_size=head_size, attn_size=attn_size, block_b=block_b)


def multi_head_attention(q, k, v, adj_matrix, params, *, head_size):
    """Pallas-backed forward matching MuliHeadAttention.forward (eval mode)."""
    wq, wk, wv, wo = params              # torch layout: [out_features, in_features]

    self_attn = (q is k) and (k is v)

    if q.ndim == 2:
        q, k, v = q[None], k[None], v[None]
    if adj_matrix.ndim == 2:
        adj_matrix = adj_matrix[None]

    B, S, Hin = q.shape
    HQ = wq.shape[0]                     # head_size * attn_size
    Hout = wo.shape[0]                   # hidden_size
    attn_size = HQ // head_size
    scale = attn_size ** (-0.5)

    assert adj_matrix.shape[0] in (1, B), (
        f"adj_matrix batch dim must be 1 or {B}, got {adj_matrix.shape[0]}")

    # Lane-dense output: pad the output-projection columns to a multiple of 128.
    Hpad = 128 * pl.cdiv(Hout, 128)

    # bf16 is the MXU-native input dtype on v5e/v6e/v7x; accumulate in f32.
    cdt = jnp.bfloat16
    q = q.astype(cdt)
    k = k.astype(cdt)
    v = v.astype(cdt)

    # Host-side layout plumbing (small one-time XLA transpose/pad):
    # Wo [Hout, HQ] -> [HQ, Hpad] so the kernel does a single lane-dense matmul.
    wo_t = jnp.pad(wo.T.astype(cdt), ((0, 0), (0, Hpad - Hout)))       # [HQ, Hpad]

    # Fold multiple batches per grid step (fills MXU rows, amortizes per-step
    # overhead) while keeping >= 2 parallel steps for v7x's two TensorCores.
    block_b = _choose_block_batch(B, S)
    n_steps = B // block_b

    adj_batched = adj_matrix.shape[0] == B
    adj_bb = block_b if adj_batched else 1
    adj_map = (lambda i: (i, 0, 0)) if adj_batched else (lambda i: (0, 0, 0))

    out_spec = pl.BlockSpec((block_b, S, Hpad), lambda i: (i, 0, 0))
    out_shape = jax.ShapeDtypeStruct((B, S, Hpad), jnp.float32)

    if self_attn:
        # Fuse the three projection weights -> one activation stream, one matmul.
        wqkv = jnp.concatenate([wq, wk, wv], axis=0).astype(cdt)       # [3HQ, Hin]
        kernel = functools.partial(_mha_self_kernel, head_size=head_size,
                                   attn_size=attn_size, block_b=block_b,
                                   scale=scale)
        in_specs = [
            pl.BlockSpec((block_b, S, Hin), lambda i: (i, 0, 0)),      # x
            pl.BlockSpec((adj_bb, S, adj_matrix.shape[-1]), adj_map),  # adj
            pl.BlockSpec((3 * HQ, Hin), lambda i: (0, 0)),             # Wqkv
            pl.BlockSpec((HQ, Hpad), lambda i: (0, 0)),                # Wo.T (padded)
        ]
        args = (q, adj_matrix, wqkv, wo_t)
    else:
        kernel = functools.partial(_mha_kernel, head_size=head_size,
                                   attn_size=attn_size, block_b=block_b,
                                   scale=scale)
        in_specs = [
            pl.BlockSpec((block_b, S, Hin), lambda i: (i, 0, 0)),      # q
            pl.BlockSpec((block_b, S, Hin), lambda i: (i, 0, 0)),      # k
            pl.BlockSpec((block_b, S, Hin), lambda i: (i, 0, 0)),      # v
            pl.BlockSpec((adj_bb, S, adj_matrix.shape[-1]), adj_map),  # adj
            pl.BlockSpec((HQ, Hin), lambda i: (0, 0)),                 # Wq
            pl.BlockSpec((HQ, Hin), lambda i: (0, 0)),                 # Wk
            pl.BlockSpec((HQ, Hin), lambda i: (0, 0)),                 # Wv
            pl.BlockSpec((HQ, Hpad), lambda i: (0, 0)),                # Wo.T (padded)
        ]
        args = (q, k, v, adj_matrix, wq.astype(cdt), wk.astype(cdt),
                wv.astype(cdt), wo_t)

    out = pl.pallas_call(
        kernel,
        out_shape=out_shape,
        grid=(n_steps,),
        in_specs=in_specs,
        out_specs=out_spec,
        compiler_params=pltpu.CompilerParams(
            dimension_semantics=("parallel",)),
    )(*args)

    out = out[..., :Hout]
    # reproduce the torch quirk: squeeze when batch dim is 1
    if B == 1:
        out = out[0]
    return out


def xavier_uniform(key, shape):
    fan_out, fan_in = shape
    bound = math.sqrt(6.0 / (fan_in + fan_out))
    return jax.random.uniform(key, shape, jnp.float32, -bound, bound)


def reference_mha(q, k, v, adj, params, head_size):
    """Plain-JAX f32 reference (same math as the torch module, eval mode)."""
    wq, wk, wv, wo = [p.astype(jnp.float32) for p in params]
    if q.ndim == 2:
        q, k, v = q[None], k[None], v[None]
    if adj.ndim == 2:
        adj = adj[None]
    q = q.astype(jnp.float32)
    k = k.astype(jnp.float32)
    v = v.astype(jnp.float32)
    adj = adj.astype(jnp.float32)
    B, S, _ = q.shape
    HQ = wq.shape[0]
    a = HQ // head_size
    scale = a ** (-0.5)

    def proj(x, w):
        y = x @ w.T
        return y.reshape(B, S, head_size, a).transpose(0, 2, 1, 3)

    qh = proj(q, wq) * scale
    kh = proj(k, wk)
    vh = proj(v, wv)
    s = jnp.einsum("bhqa,bhka->bhqk", qh, kh)
    s = adj[:, None, :, :] * s
    p = jax.nn.softmax(s, axis=-1)
    ctx = jnp.einsum("bhqk,bhka->bhqa", p, vh)
    ctx = ctx.transpose(0, 2, 1, 3).reshape(B, S, HQ)
    out = ctx @ wo.T
    if B == 1:
        out = out[0]
    return out


if __name__ == "__main__":
    B, S = 4, 16
    head_size = 6
    hidden_size = 48          # attn_size = 8
    dropout_rate = 0.1        # eval mode -> identity

    key = jax.random.PRNGKey(0)
    k_wq, k_wk, k_wv, k_wo, k_x, k_q, k_k, k_v, k_adj = jax.random.split(key, 9)

    # bf16 parameters/activations in HBM (bf16 MXU path); f32 accumulation in-kernel.
    params = tuple(
        xavier_uniform(kk, (hidden_size, hidden_size)).astype(jnp.bfloat16)
        for kk in (k_wq, k_wk, k_wv, k_wo))

    adj = (jax.random.uniform(k_adj, (B, S, S)) > 0.5).astype(jnp.bfloat16)  # 0/1 exact

    # Tolerance reflects end-to-end bf16 MXU feeding (projections, p, ctx, Wo all
    # bf16; f32 only in accumulation / softmax math) vs. the all-f32 reference.
    ATOL = RTOL = 3e-2

    # --- self-attention (fused-QKV path, batch-folded grid: block_b=2, 2 steps) ---
    x = jax.random.normal(k_x, (B, S, hidden_size), jnp.float32).astype(jnp.bfloat16)
    out_self = multi_head_attention(x, x, x, adj, params, head_size=head_size)
    out_self = jax.block_until_ready(out_self)
    ref_self = reference_mha(x, x, x, adj, params, head_size)
    assert out_self.shape == ref_self.shape, (out_self.shape, ref_self.shape)
    err_self = float(jnp.max(jnp.abs(out_self - ref_self)))
    assert jnp.allclose(out_self, ref_self, atol=ATOL, rtol=RTOL), err_self

    # --- cross-attention (general path: separate q/k/v projections) ---
    q = jax.random.normal(k_q, (B, S, hidden_size), jnp.float32).astype(jnp.bfloat16)
    kk = jax.random.normal(k_k, (B, S, hidden_size), jnp.float32).astype(jnp.bfloat16)
    v = jax.random.normal(k_v, (B, S, hidden_size), jnp.float32).astype(jnp.bfloat16)
    out_x = multi_head_attention(q, kk, v, adj, params, head_size=head_size)
    out_x = jax.block_until_ready(out_x)
    ref_x = reference_mha(q, kk, v, adj, params, head_size)
    assert out_x.shape == ref_x.shape, (out_x.shape, ref_x.shape)
    err_x = float(jnp.max(jnp.abs(out_x - ref_x)))
    assert jnp.allclose(out_x, ref_x, atol=ATOL, rtol=RTOL), err_x

    print("KERNEL_OK")
</pallas_src>

<mosaic_0001>
module attributes {stable_mosaic.version = 11 : i64} {
  func.func @_mha_self_kernel(%arg0: i32, %arg1: memref<2x16x48xbf16, #tpu.memory_space<vmem>>, %arg2: memref<2x16x16xbf16, #tpu.memory_space<vmem>>, %arg3: memref<144x48xbf16, #tpu.memory_space<vmem>>, %arg4: memref<48x128xbf16, #tpu.memory_space<vmem>>, %arg5: memref<2x16x128xf32, #tpu.memory_space<vmem>>) attributes {dimension_semantics = [#tpu.dimension_semantics<parallel>], iteration_bounds = array<i64: 2>, scalar_prefetch = 0 : i64, scratch_operands = 0 : i64, tpu.core_type = #tpu.core_type<tc>, window_params = [{transform_indices = @transform_0, window_bounds = array<i64: 2, 16, 48>}, {transform_indices = @transform_1, window_bounds = array<i64: 2, 16, 16>}, {pipeline_mode = #tpu.pipeline_mode<synchronous>, transform_indices = @transform_2, window_bounds = array<i64: 144, 48>}, {pipeline_mode = #tpu.pipeline_mode<synchronous>, transform_indices = @transform_3, window_bounds = array<i64: 48, 128>}, {transform_indices = @transform_4, window_bounds = array<i64: 2, 16, 128>}]} {
    %c0 = arith.constant 0 : index
    %c0_0 = arith.constant 0 : index
    %c0_1 = arith.constant 0 : index
    %0 = vector.load %arg1[%c0, %c0_0, %c0_1] : memref<2x16x48xbf16, #tpu.memory_space<vmem>>, vector<2x16x48xbf16>
    %1 = vector.shape_cast %0 : vector<2x16x48xbf16> to vector<32x48xbf16>
    %c0_2 = arith.constant 0 : index
    %c0_3 = arith.constant 0 : index
    %2 = vector.load %arg3[%c0_2, %c0_3] : memref<144x48xbf16, #tpu.memory_space<vmem>>, vector<144x48xbf16>
    %cst = arith.constant dense<0.000000e+00> : vector<32x144xf32>
    %3 = tpu.matmul %1, %2, %cst {dimension_numbers = #tpu.dot_dimension_numbers<[1], [1], [0], [0], [0, 0, 1, 0], [], []>} : vector<32x48xbf16>, vector<144x48xbf16>, vector<32x144xf32> -> vector<32x144xf32>
    %4 = vector.extract_strided_slice %3 {offsets = [0, 0], sizes = [32, 48], strides = [1, 1]} : vector<32x144xf32> to vector<32x48xf32>
    %cst_4 = arith.constant 0.353553385 : f32
    %5 = vector.broadcast %cst_4 : f32 to vector<32x48xf32>
    %6 = arith.mulf %4, %5 : vector<32x48xf32>
    %7 = arith.truncf %6 : vector<32x48xf32> to vector<32x48xbf16>
    %8 = vector.extract_strided_slice %3 {offsets = [0, 48], sizes = [32, 48], strides = [1, 1]} : vector<32x144xf32> to vector<32x48xf32>
    %9 = arith.truncf %8 : vector<32x48xf32> to vector<32x48xbf16>
    %10 = vector.extract_strided_slice %3 {offsets = [0, 96], sizes = [32, 48], strides = [1, 1]} : vector<32x144xf32> to vector<32x48xf32>
    %11 = arith.truncf %10 : vector<32x48xf32> to vector<32x48xbf16>
    %c0_5 = arith.constant 0 : index
    %c0_6 = arith.constant 0 : index
    %c0_7 = arith.constant 0 : index
    %12 = vector.load %arg2[%c0_5, %c0_6, %c0_7] : memref<2x16x16xbf16, #tpu.memory_space<vmem>>, vector<1x16x16xbf16>
    %13 = vector.shape_cast %12 : vector<1x16x16xbf16> to vector<16x16xbf16>
    %14 = arith.extf %13 : vector<16x16xbf16> to vector<16x16xf32>
    %15 = vector.extract_strided_slice %7 {offsets = [0, 0], sizes = [16, 8], strides = [1, 1]} : vector<32x48xbf16> to vector<16x8xbf16>
    %16 = vector.extract_strided_slice %9 {offsets = [0, 0], sizes = [16, 8], strides = [1, 1]} : vector<32x48xbf16> to vector<16x8xbf16>
    %17 = vector.extract_strided_slice %11 {offsets = [0, 0], sizes = [16, 8], strides = [1, 1]} : vector<32x48xbf16> to vector<16x8xbf16>
    %cst_8 = arith.constant dense<0.000000e+00> : vector<16x16xf32>
    %18 = tpu.matmul %15, %16, %cst_8 {dimension_numbers = #tpu.dot_dimension_numbers<[1], [1], [0], [0], [0, 0, 1, 0], [], []>} : vector<16x8xbf16>, vector<16x8xbf16>, vector<16x16xf32> -> vector<16x16xf32>
    %19 = arith.mulf %14, %18 : vector<16x16xf32>
    %cst_9 = arith.constant dense<0xFF800000> : vector<16xf32>
    %20 = vector.multi_reduction <maximumf>, %19, %cst_9 [1] : vector<16x16xf32> to vector<16xf32>
    %21 = vector.shape_cast %20 : vector<16xf32> to vector<16x1xf32>
    %22 = vector.broadcast %21 : vector<16x1xf32> to vector<16x16xf32>
    %23 = arith.subf %19, %22 : vector<16x16xf32>
    %24 = math.exp %23 : vector<16x16xf32>
    %cst_10 = arith.constant dense<0.000000e+00> : vector<16xf32>
    %25 = vector.multi_reduction <add>, %24, %cst_10 [1] : vector<16x16xf32> to vector<16xf32>
    %26 = vector.shape_cast %25 : vector<16xf32> to vector<16x1xf32>
    %27 = tpu.reciprocal %26 {approx = true} : vector<16x1xf32> -> vector<16x1xf32>
    %28 = vector.broadcast %27 : vector<16x1xf32> to vector<16x16xf32>
    %29 = arith.mulf %24, %28 : vector<16x16xf32>
    %30 = arith.truncf %29 : vector<16x16xf32> to vector<16x16xbf16>
    %cst_11 = arith.constant dense<0.000000e+00> : vector<16x8xf32>
    %31 = tpu.matmul %30, %17, %cst_11 {dimension_numbers = #tpu.dot_dimension_numbers<[1], [0], [0], [1], [0, 0, 1, 1], [], []>} : vector<16x16xbf16>, vector<16x8xbf16>, vector<16x8xf32> -> vector<16x8xf32>
    %32 = vector.extract_strided_slice %7 {offsets = [0, 8], sizes = [16, 8], strides = [1, 1]} : vector<32x48xbf16> to vector<16x8xbf16>
    %33 = vector.extract_strided_slice %9 {offsets = [0, 8], sizes = [16, 8], strides = [1, 1]} : vector<32x48xbf16> to vector<16x8xbf16>
    %34 = vector.extract_strided_slice %11 {offsets = [0, 8], sizes = [16, 8], strides = [1, 1]} : vector<32x48xbf16> to vector<16x8xbf16>
    %cst_12 = arith.constant dense<0.000000e+00> : vector<16x16xf32>
    %35 = tpu.matmul %32, %33, %cst_12 {dimension_numbers = #tpu.dot_dimension_numbers<[1], [1], [0], [0], [0, 0, 1, 0], [], []>} : vector<16x8xbf16>, vector<16x8xbf16>, vector<16x16xf32> -> vector<16x16xf32>
    %36 = arith.mulf %14, %35 : vector<16x16xf32>
    %cst_13 = arith.constant dense<0xFF800000> : vector<16xf32>
    %37 = vector.multi_reduction <maximumf>, %36, %cst_13 [1] : vector<16x16xf32> to vector<16xf32>
    %38 = vector.shape_cast %37 : vector<16xf32> to vector<16x1xf32>
    %39 = vector.broadcast %38 : vector<16x1xf32> to vector<16x16xf32>
    %40 = arith.subf %36, %39 : vector<16x16xf32>
    %41 = math.exp %40 : vector<16x16xf32>
    %cst_14 = arith.constant dense<0.000000e+00> : vector<16xf32>
    %42 = vector.multi_reduction <add>, %41, %cst_14 [1] : vector<16x16xf32> to vector<16xf32>
    %43 = vector.shape_cast %42 : vector<16xf32> to vector<16x1xf32>
    %44 = tpu.reciprocal %43 {approx = true} : vector<16x1xf32> -> vector<16x1xf32>
    %45 = vector.broadcast %44 : vector<16x1xf32> to vector<16x16xf32>
    %46 = arith.mulf %41, %45 : vector<16x16xf32>
    %47 = arith.truncf %46 : vector<16x16xf32> to vector<16x16xbf16>
    %cst_15 = arith.constant dense<0.000000e+00> : vector<16x8xf32>
    %48 = tpu.matmul %47, %34, %cst_15 {dimension_numbers = #tpu.dot_dimension_numbers<[1], [0], [0], [1], [0, 0, 1, 1], [], []>} : vector<16x16xbf16>, vector<16x8xbf16>, vector<16x8xf32> -> vector<16x8xf32>
    %49 = vector.extract_strided_slice %7 {offsets = [0, 16], sizes = [16, 8], strides = [1, 1]} : vector<32x48xbf16> to vector<16x8xbf16>
    %50 = vector.extract_strided_slice %9 {offsets = [0, 16], sizes = [16, 8], strides = [1, 1]} : vector<32x48xbf16> to vector<16x8xbf16>
    %51 = vector.extract_strided_slice %11 {offsets = [0, 16], sizes = [16, 8], strides = [1, 1]} : vector<32x48xbf16> to vector<16x8xbf16>
    %cst_16 = arith.constant dense<0.000000e+00> : vector<16x16xf32>
    %52 = tpu.matmul %49, %50, %cst_16 {dimension_numbers = #tpu.dot_dimension_numbers<[1], [1], [0], [0], [0, 0, 1, 0], [], []>} : vector<16x8xbf16>, vector<16x8xbf16>, vector<16x16xf32> -> vector<16x16xf32>
    %53 = arith.mulf %14, %52 : vector<16x16xf32>
    %cst_17 = arith.constant dense<0xFF800000> : vector<16xf32>
    %54 = vector.multi_reduction <maximumf>, %53, %cst_17 [1] : vector<16x16xf32> to vector<16xf32>
    %55 = vector.shape_cast %54 : vector<16xf32> to vector<16x1xf32>
    %56 = vector.broadcast %55 : vector<16x1xf32> to vector<16x16xf32>
    %57 = arith.subf %53, %56 : vector<16x16xf32>
    %58 = math.exp %57 : vector<16x16xf32>
    %cst_18 = arith.constant dense<0.000000e+00> : vector<16xf32>
    %59 = vector.multi_reduction <add>, %58, %cst_18 [1] : vector<16x16xf32> to vector<16xf32>
    %60 = vector.shape_cast %59 : vector<16xf32> to vector<16x1xf32>
    %61 = tpu.reciprocal %60 {approx = true} : vector<16x1xf32> -> vector<16x1xf32>
    %62 = vector.broadcast %61 : vector<16x1xf32> to vector<16x16xf32>
    %63 = arith.mulf %58, %62 : vector<16x16xf32>
    %64 = arith.truncf %63 : vector<16x16xf32> to vector<16x16xbf16>
    %cst_19 = arith.constant dense<0.000000e+00> : vector<16x8xf32>
    %65 = tpu.matmul %64, %51, %cst_19 {dimension_numbers = #tpu.dot_dimension_numbers<[1], [0], [0], [1], [0, 0, 1, 1], [], []>} : vector<16x16xbf16>, vector<16x8xbf16>, vector<16x8xf32> -> vector<16x8xf32>
    %66 = vector.extract_strided_slice %7 {offsets = [0, 24], sizes = [16, 8], strides = [1, 1]} : vector<32x48xbf16> to vector<16x8xbf16>
    %67 = vector.extract_strided_slice %9 {offsets = [0, 24], sizes = [16, 8], strides = [1, 1]} : vector<32x48xbf16> to vector<16x8xbf16>
    %68 = vector.extract_strided_slice %11 {offsets = [0, 24], sizes = [16, 8], strides = [1, 1]} : vector<32x48xbf16> to vector<16x8xbf16>
    %cst_20 = arith.constant dense<0.000000e+00> : vector<16x16xf32>
    %69 = tpu.matmul %66, %67, %cst_20 {dimension_numbers = #tpu.dot_dimension_numbers<[1], [1], [0], [0], [0, 0, 1, 0], [], []>} : vector<16x8xbf16>, vector<16x8xbf16>, vector<16x16xf32> -> vector<16x16xf32>
    %70 = arith.mulf %14, %69 : vector<16x16xf32>
    %cst_21 = arith.constant dense<0xFF800000> : vector<16xf32>
    %71 = vector.multi_reduction <maximumf>, %70, %cst_21 [1] : vector<16x16xf32> to vector<16xf32>
    %72 = vector.shape_cast %71 : vector<16xf32> to vector<16x1xf32>
    %73 = vector.broadcast %72 : vector<16x1xf32> to vector<16x16xf32>
    %74 = arith.subf %70, %73 : vector<16x16xf32>
    %75 = math.exp %74 : vector<16x16xf32>
    %cst_22 = arith.constant dense<0.000000e+00> : vector<16xf32>
    %76 = vector.multi_reduction <add>, %75, %cst_22 [1] : vector<16x16xf32> to vector<16xf32>
    %77 = vector.shape_cast %76 : vector<16xf32> to vector<16x1xf32>
    %78 = tpu.reciprocal %77 {approx = true} : vector<16x1xf32> -> vector<16x1xf32>
    %79 = vector.broadcast %78 : vector<16x1xf32> to vector<16x16xf32>
    %80 = arith.mulf %75, %79 : vector<16x16xf32>
    %81 = arith.truncf %80 : vector<16x16xf32> to vector<16x16xbf16>
    %cst_23 = arith.constant dense<0.000000e+00> : vector<16x8xf32>
    %82 = tpu.matmul %81, %68, %cst_23 {dimension_numbers = #tpu.dot_dimension_numbers<[1], [0], [0], [1], [0, 0, 1, 1], [], []>} : vector<16x16xbf16>, vector<16x8xbf16>, vector<16x8xf32> -> vector<16x8xf32>
    %83 = vector.extract_strided_slice %7 {offsets = [0, 32], sizes = [16, 8], strides = [1, 1]} : vector<32x48xbf16> to vector<16x8xbf16>
    %84 = vector.extract_strided_slice %9 {offsets = [0, 32], sizes = [16, 8], strides = [1, 1]} : vector<32x48xbf16> to vector<16x8xbf16>
    %85 = vector.extract_strided_slice %11 {offsets = [0, 32], sizes = [16, 8], strides = [1, 1]} : vector<32x48xbf16> to vector<16x8xbf16>
    %cst_24 = arith.constant dense<0.000000e+00> : vector<16x16xf32>
    %86 = tpu.matmul %83, %84, %cst_24 {dimension_numbers = #tpu.dot_dimension_numbers<[1], [1], [0], [0], [0, 0, 1, 0], [], []>} : vector<16x8xbf16>, vector<16x8xbf16>, vector<16x16xf32> -> vector<16x16xf32>
    %87 = arith.mulf %14, %86 : vector<16x16xf32>
    %cst_25 = arith.constant dense<0xFF800000> : vector<16xf32>
    %88 = vector.multi_reduction <maximumf>, %87, %cst_25 [1] : vector<16x16xf32> to vector<16xf32>
    %89 = vector.shape_cast %88 : vector<16xf32> to vector<16x1xf32>
    %90 = vector.broadcast %89 : vector<16x1xf32> to vector<16x16xf32>
    %91 = arith.subf %87, %90 : vector<16x16xf32>
    %92 = math.exp %91 : vector<16x16xf32>
    %cst_26 = arith.constant dense<0.000000e+00> : vector<16xf32>
    %93 = vector.multi_reduction <add>, %92, %cst_26 [1] : vector<16x16xf32> to vector<16xf32>
    %94 = vector.shape_cast %93 : vector<16xf32> to vector<16x1xf32>
    %95 = tpu.reciprocal %94 {approx = true} : vector<16x1xf32> -> vector<16x1xf32>
    %96 = vector.broadcast %95 : vector<16x1xf32> to vector<16x16xf32>
    %97 = arith.mulf %92, %96 : vector<16x16xf32>
    %98 = arith.truncf %97 : vector<16x16xf32> to vector<16x16xbf16>
    %cst_27 = arith.constant dense<0.000000e+00> : vector<16x8xf32>
    %99 = tpu.matmul %98, %85, %cst_27 {dimension_numbers = #tpu.dot_dimension_numbers<[1], [0], [0], [1], [0, 0, 1, 1], [], []>} : vector<16x16xbf16>, vector<16x8xbf16>, vector<16x8xf32> -> vector<16x8xf32>
    %100 = vector.extract_strided_slice %7 {offsets = [0, 40], sizes = [16, 8], strides = [1, 1]} : vector<32x48xbf16> to vector<16x8xbf16>
    %101 = vector.extract_strided_slice %9 {offsets = [0, 40], sizes = [16, 8], strides = [1, 1]} : vector<32x48xbf16> to vector<16x8xbf16>
    %102 = vector.extract_strided_slice %11 {offsets = [0, 40], sizes = [16, 8], strides = [1, 1]} : vector<32x48xbf16> to vector<16x8xbf16>
    %cst_28 = arith.constant dense<0.000000e+00> : vector<16x16xf32>
    %103 = tpu.matmul %100, %101, %cst_28 {dimension_numbers = #tpu.dot_dimension_numbers<[1], [1], [0], [0], [0, 0, 1, 0], [], []>} : vector<16x8xbf16>, vector<16x8xbf16>, vector<16x16xf32> -> vector<16x16xf32>
    %104 = arith.mulf %14, %103 : vector<16x16xf32>
    %cst_29 = arith.constant dense<0xFF800000> : vector<16xf32>
    %105 = vector.multi_reduction <maximumf>, %104, %cst_29 [1] : vector<16x16xf32> to vector<16xf32>
    %106 = vector.shape_cast %105 : vector<16xf32> to vector<16x1xf32>
    %107 = vector.broadcast %106 : vector<16x1xf32> to vector<16x16xf32>
    %108 = arith.subf %104, %107 : vector<16x16xf32>
    %109 = math.exp %108 : vector<16x16xf32>
    %cst_30 = arith.constant dense<0.000000e+00> : vector<16xf32>
    %110 = vector.multi_reduction <add>, %109, %cst_30 [1] : vector<16x16xf32> to vector<16xf32>
    %111 = vector.shape_cast %110 : vector<16xf32> to vector<16x1xf32>
    %112 = tpu.reciprocal %111 {approx = true} : vector<16x1xf32> -> vector<16x1xf32>
    %113 = vector.broadcast %112 : vector<16x1xf32> to vector<16x16xf32>
    %114 = arith.mulf %109, %113 : vector<16x16xf32>
    %115 = arith.truncf %114 : vector<16x16xf32> to vector<16x16xbf16>
    %cst_31 = arith.constant dense<0.000000e+00> : vector<16x8xf32>
    %116 = tpu.matmul %115, %102, %cst_31 {dimension_numbers = #tpu.dot_dimension_numbers<[1], [0], [0], [1], [0, 0, 1, 1], [], []>} : vector<16x16xbf16>, vector<16x8xbf16>, vector<16x8xf32> -> vector<16x8xf32>
    %117 = tpu.concatenate %31, %48, %65, %82, %99, %116 in 1 : vector<16x8xf32>, vector<16x8xf32>, vector<16x8xf32>, vector<16x8xf32>, vector<16x8xf32>, vector<16x8xf32> -> vector<16x48xf32>
    %c1 = arith.constant 1 : index
    %c0_32 = arith.constant 0 : index
    %c0_33 = arith.constant 0 : index
    %118 = vector.load %arg2[%c1, %c0_32, %c0_33] : memref<2x16x16xbf16, #tpu.memory_space<vmem>>, vector<1x16x16xbf16>
    %119 = vector.shape_cast %118 : vector<1x16x16xbf16> to vector<16x16xbf16>
    %120 = arith.extf %119 : vector<16x16xbf16> to vector<16x16xf32>
    %121 = vector.extract_strided_slice %7 {offsets = [16, 0], sizes = [16, 8], strides = [1, 1]} : vector<32x48xbf16> to vector<16x8xbf16>
    %122 = vector.extract_strided_slice %9 {offsets = [16, 0], sizes = [16, 8], strides = [1, 1]} : vector<32x48xbf16> to vector<16x8xbf16>
    %123 = vector.extract_strided_slice %11 {offsets = [16, 0], sizes = [16, 8], strides = [1, 1]} : vector<32x48xbf16> to vector<16x8xbf16>
    %cst_34 = arith.constant dense<0.000000e+00> : vector<16x16xf32>
    %124 = tpu.matmul %121, %122, %cst_34 {dimension_numbers = #tpu.dot_dimension_numbers<[1], [1], [0], [0], [0, 0, 1, 0], [], []>} : vector<16x8xbf16>, vector<16x8xbf16>, vector<16x16xf32> -> vector<16x16xf32>
    %125 = arith.mulf %120, %124 : vector<16x16xf32>
    %cst_35 = arith.constant dense<0xFF800000> : vector<16xf32>
    %126 = vector.multi_reduction <maximumf>, %125, %cst_35 [1] : vector<16x16xf32> to vector<16xf32>
    %127 = vector.shape_cast %126 : vector<16xf32> to vector<16x1xf32>
    %128 = vector.broadcast %127 : vector<16x1xf32> to vector<16x16xf32>
    %129 = arith.subf %125, %128 : vector<16x16xf32>
    %130 = math.exp %129 : vector<16x16xf32>
    %cst_36 = arith.constant dense<0.000000e+00> : vector<16xf32>
    %131 = vector.multi_reduction <add>, %130, %cst_36 [1] : vector<16x16xf32> to vector<16xf32>
    %132 = vector.shape_cast %131 : vector<16xf32> to vector<16x1xf32>
    %133 = tpu.reciprocal %132 {approx = true} : vector<16x1xf32> -> vector<16x1xf32>
    %134 = vector.broadcast %133 : vector<16x1xf32> to vector<16x16xf32>
    %135 = arith.mulf %130, %134 : vector<16x16xf32>
    %136 = arith.truncf %135 : vector<16x16xf32> to vector<16x16xbf16>
    %cst_37 = arith.constant dense<0.000000e+00> : vector<16x8xf32>
    %137 = tpu.matmul %136, %123, %cst_37 {dimension_numbers = #tpu.dot_dimension_numbers<[1], [0], [0], [1], [0, 0, 1, 1], [], []>} : vector<16x16xbf16>, vector<16x8xbf16>, vector<16x8xf32> -> vector<16x8xf32>
    %138 = vector.extract_strided_slice %7 {offsets = [16, 8], sizes = [16, 8], strides = [1, 1]} : vector<32x48xbf16> to vector<16x8xbf16>
    %139 = vector.extract_strided_slice %9 {offsets = [16, 8], sizes = [16, 8], strides = [1, 1]} : vector<32x48xbf16> to vector<16x8xbf16>
    %140 = vector.extract_strided_slice %11 {offsets = [16, 8], sizes = [16, 8], strides = [1, 1]} : vector<32x48xbf16> to vector<16x8xbf16>
    %cst_38 = arith.constant dense<0.000000e+00> : vector<16x16xf32>
    %141 = tpu.matmul %138, %139, %cst_38 {dimension_numbers = #tpu.dot_dimension_numbers<[1], [1], [0], [0], [0, 0, 1, 0], [], []>} : vector<16x8xbf16>, vector<16x8xbf16>, vector<16x16xf32> -> vector<16x16xf32>
    %142 = arith.mulf %120, %141 : vector<16x16xf32>
    %cst_39 = arith.constant dense<0xFF800000> : vector<16xf32>
    %143 = vector.multi_reduction <maximumf>, %142, %cst_39 [1] : vector<16x16xf32> to vector<16xf32>
    %144 = vector.shape_cast %143 : vector<16xf32> to vector<16x1xf32>
    %145 = vector.broadcast %144 : vector<16x1xf32> to vector<16x16xf32>
    %146 = arith.subf %142, %145 : vector<16x16xf32>
    %147 = math.exp %146 : vector<16x16xf32>
    %cst_40 = arith.constant dense<0.000000e+00> : vector<16xf32>
    %148 = vector.multi_reduction <add>, %147, %cst_40 [1] : vector<16x16xf32> to vector<16xf32>
    %149 = vector.shape_cast %148 : vector<16xf32> to vector<16x1xf32>
    %150 = tpu.reciprocal %149 {approx = true} : vector<16x1xf32> -> vector<16x1xf32>
    %151 = vector.broadcast %150 : vector<16x1xf32> to vector<16x16xf32>
    %152 = arith.mulf %147, %151 : vector<16x16xf32>
    %153 = arith.truncf %152 : vector<16x16xf32> to vector<16x16xbf16>
    %cst_41 = arith.constant dense<0.000000e+00> : vector<16x8xf32>
    %154 = tpu.matmul %153, %140, %cst_41 {dimension_numbers = #tpu.dot_dimension_numbers<[1], [0], [0], [1], [0, 0, 1, 1], [], []>} : vector<16x16xbf16>, vector<16x8xbf16>, vector<16x8xf32> -> vector<16x8xf32>
    %155 = vector.extract_strided_slice %7 {offsets = [16, 16], sizes = [16, 8], strides = [1, 1]} : vector<32x48xbf16> to vector<16x8xbf16>
    %156 = vector.extract_strided_slice %9 {offsets = [16, 16], sizes = [16, 8], strides = [1, 1]} : vector<32x48xbf16> to vector<16x8xbf16>
    %157 = vector.extract_strided_slice %11 {offsets = [16, 16], sizes = [16, 8], strides = [1, 1]} : vector<32x48xbf16> to vector<16x8xbf16>
    %cst_42 = arith.constant dense<0.000000e+00> : vector<16x16xf32>
    %158 = tpu.matmul %155, %156, %cst_42 {dimension_numbers = #tpu.dot_dimension_numbers<[1], [1], [0], [0], [0, 0, 1, 0], [], []>} : vector<16x8xbf16>, vector<16x8xbf16>, vector<16x16xf32> -> vector<16x16xf32>
    %159 = arith.mulf %120, %158 : vector<16x16xf32>
    %cst_43 = arith.constant dense<0xFF800000> : vector<16xf32>
    %160 = vector.multi_reduction <maximumf>, %159, %cst_43 [1] : vector<16x16xf32> to vector<16xf32>
    %161 = vector.shape_cast %160 : vector<16xf32> to vector<16x1xf32>
    %162 = vector.broadcast %161 : vector<16x1xf32> to vector<16x16xf32>
    %163 = arith.subf %159, %162 : vector<16x16xf32>
    %164 = math.exp %163 : vector<16x16xf32>
    %cst_44 = arith.constant dense<0.000000e+00> : vector<16xf32>
    %165 = vector.multi_reduction <add>, %164, %cst_44 [1] : vector<16x16xf32> to vector<16xf32>
    %166 = vector.shape_cast %165 : vector<16xf32> to vector<16x1xf32>
    %167 = tpu.reciprocal %166 {approx = true} : vector<16x1xf32> -> vector<16x1xf32>
    %168 = vector.broadcast %167 : vector<16x1xf32> to vector<16x16xf32>
    %169 = arith.mulf %164, %168 : vector<16x16xf32>
    %170 = arith.truncf %169 : vector<16x16xf32> to vector<16x16xbf16>
    %cst_45 = arith.constant dense<0.000000e+00> : vector<16x8xf32>
    %171 = tpu.matmul %170, %157, %cst_45 {dimension_numbers = #tpu.dot_dimension_numbers<[1], [0], [0], [1], [0, 0, 1, 1], [], []>} : vector<16x16xbf16>, vector<16x8xbf16>, vector<16x8xf32> -> vector<16x8xf32>
    %172 = vector.extract_strided_slice %7 {offsets = [16, 24], sizes = [16, 8], strides = [1, 1]} : vector<32x48xbf16> to vector<16x8xbf16>
    %173 = vector.extract_strided_slice %9 {offsets = [16, 24], sizes = [16, 8], strides = [1, 1]} : vector<32x48xbf16> to vector<16x8xbf16>
    %174 = vector.extract_strided_slice %11 {offsets = [16, 24], sizes = [16, 8], strides = [1, 1]} : vector<32x48xbf16> to vector<16x8xbf16>
    %cst_46 = arith.constant dense<0.000000e+00> : vector<16x16xf32>
    %175 = tpu.matmul %172, %173, %cst_46 {dimension_numbers = #tpu.dot_dimension_numbers<[1], [1], [0], [0], [0, 0, 1, 0], [], []>} : vector<16x8xbf16>, vector<16x8xbf16>, vector<16x16xf32> -> vector<16x16xf32>
    %176 = arith.mulf %120, %175 : vector<16x16xf32>
    %cst_47 = arith.constant dense<0xFF800000> : vector<16xf32>
    %177 = vector.multi_reduction <maximumf>, %176, %cst_47 [1] : vector<16x16xf32> to vector<16xf32>
    %178 = vector.shape_cast %177 : vector<16xf32> to vector<16x1xf32>
    %179 = vector.broadcast %178 : vector<16x1xf32> to vector<16x16xf32>
    %180 = arith.subf %176, %179 : vector<16x16xf32>
    %181 = math.exp %180 : vector<16x16xf32>
    %cst_48 = arith.constant dense<0.000000e+00> : vector<16xf32>
    %182 = vector.multi_reduction <add>, %181, %cst_48 [1] : vector<16x16xf32> to vector<16xf32>
    %183 = vector.shape_cast %182 : vector<16xf32> to vector<16x1xf32>
    %184 = tpu.reciprocal %183 {approx = true} : vector<16x1xf32> -> vector<16x1xf32>
    %185 = vector.broadcast %184 : vector<16x1xf32> to vector<16x16xf32>
    %186 = arith.mulf %181, %185 : vector<16x16xf32>
    %187 = arith.truncf %186 : vector<16x16xf32> to vector<16x16xbf16>
    %cst_49 = arith.constant dense<0.000000e+00> : vector<16x8xf32>
    %188 = tpu.matmul %187, %174, %cst_49 {dimension_numbers = #tpu.dot_dimension_numbers<[1], [0], [0], [1], [0, 0, 1, 1], [], []>} : vector<16x16xbf16>, vector<16x8xbf16>, vector<16x8xf32> -> vector<16x8xf32>
    %189 = vector.extract_strided_slice %7 {offsets = [16, 32], sizes = [16, 8], strides = [1, 1]} : vector<32x48xbf16> to vector<16x8xbf16>
    %190 = vector.extract_strided_slice %9 {offsets = [16, 32], sizes = [16, 8], strides = [1, 1]} : vector<32x48xbf16> to vector<16x8xbf16>
    %191 = vector.extract_strided_slice %11 {offsets = [16, 32], sizes = [16, 8], strides = [1, 1]} : vector<32x48xbf16> to vector<16x8xbf16>
    %cst_50 = arith.constant dense<0.000000e+00> : vector<16x16xf32>
    %192 = tpu.matmul %189, %190, %cst_50 {dimension_numbers = #tpu.dot_dimension_numbers<[1], [1], [0], [0], [0, 0, 1, 0], [], []>} : vector<16x8xbf16>, vector<16x8xbf16>, vector<16x16xf32> -> vector<16x16xf32>
    %193 = arith.mulf %120, %192 : vector<16x16xf32>
    %cst_51 = arith.constant dense<0xFF800000> : vector<16xf32>
    %194 = vector.multi_reduction <maximumf>, %193, %cst_51 [1] : vector<16x16xf32> to vector<16xf32>
    %195 = vector.shape_cast %194 : vector<16xf32> to vector<16x1xf32>
    %196 = vector.broadcast %195 : vector<16x1xf32> to vector<16x16xf32>
    %197 = arith.subf %193, %196 : vector<16x16xf32>
    %198 = math.exp %197 : vector<16x16xf32>
    %cst_52 = arith.constant dense<0.000000e+00> : vector<16xf32>
    %199 = vector.multi_reduction <add>, %198, %cst_52 [1] : vector<16x16xf32> to vector<16xf32>
    %200 = vector.shape_cast %199 : vector<16xf32> to vector<16x1xf32>
    %201 = tpu.reciprocal %200 {approx = true} : vector<16x1xf32> -> vector<16x1xf32>
    %202 = vector.broadcast %201 : vector<16x1xf32> to vector<16x16xf32>
    %203 = arith.mulf %198, %202 : vector<16x16xf32>
    %204 = arith.truncf %203 : vector<16x16xf32> to vector<16x16xbf16>
    %cst_53 = arith.constant dense<0.000000e+00> : vector<16x8xf32>
    %205 = tpu.matmul %204, %191, %cst_53 {dimension_numbers = #tpu.dot_dimension_numbers<[1], [0], [0], [1], [0, 0, 1, 1], [], []>} : vector<16x16xbf16>, vector<16x8xbf16>, vector<16x8xf32> -> vector<16x8xf32>
    %206 = vector.extract_strided_slice %7 {offsets = [16, 40], sizes = [16, 8], strides = [1, 1]} : vector<32x48xbf16> to vector<16x8xbf16>
    %207 = vector.extract_strided_slice %9 {offsets = [16, 40], sizes = [16, 8], strides = [1, 1]} : vector<32x48xbf16> to vector<16x8xbf16>
    %208 = vector.extract_strided_slice %11 {offsets = [16, 40], sizes = [16, 8], strides = [1, 1]} : vector<32x48xbf16> to vector<16x8xbf16>
    %cst_54 = arith.constant dense<0.000000e+00> : vector<16x16xf32>
    %209 = tpu.matmul %206, %207, %cst_54 {dimension_numbers = #tpu.dot_dimension_numbers<[1], [1], [0], [0], [0, 0, 1, 0], [], []>} : vector<16x8xbf16>, vector<16x8xbf16>, vector<16x16xf32> -> vector<16x16xf32>
    %210 = arith.mulf %120, %209 : vector<16x16xf32>
    %cst_55 = arith.constant dense<0xFF800000> : vector<16xf32>
    %211 = vector.multi_reduction <maximumf>, %210, %cst_55 [1] : vector<16x16xf32> to vector<16xf32>
    %212 = vector.shape_cast %211 : vector<16xf32> to vector<16x1xf32>
    %213 = vector.broadcast %212 : vector<16x1xf32> to vector<16x16xf32>
    %214 = arith.subf %210, %213 : vector<16x16xf32>
    %215 = math.exp %214 : vector<16x16xf32>
    %cst_56 = arith.constant dense<0.000000e+00> : vector<16xf32>
    %216 = vector.multi_reduction <add>, %215, %cst_56 [1] : vector<16x16xf32> to vector<16xf32>
    %217 = vector.shape_cast %216 : vector<16xf32> to vector<16x1xf32>
    %218 = tpu.reciprocal %217 {approx = true} : vector<16x1xf32> -> vector<16x1xf32>
    %219 = vector.broadcast %218 : vector<16x1xf32> to vector<16x16xf32>
    %220 = arith.mulf %215, %219 : vector<16x16xf32>
    %221 = arith.truncf %220 : vector<16x16xf32> to vector<16x16xbf16>
    %cst_57 = arith.constant dense<0.000000e+00> : vector<16x8xf32>
    %222 = tpu.matmul %221, %208, %cst_57 {dimension_numbers = #tpu.dot_dimension_numbers<[1], [0], [0], [1], [0, 0, 1, 1], [], []>} : vector<16x16xbf16>, vector<16x8xbf16>, vector<16x8xf32> -> vector<16x8xf32>
    %223 = tpu.concatenate %137, %154, %171, %188, %205, %222 in 1 : vector<16x8xf32>, vector<16x8xf32>, vector<16x8xf32>, vector<16x8xf32>, vector<16x8xf32>, vector<16x8xf32> -> vector<16x48xf32>
    %224 = tpu.concatenate %117, %223 in 0 : vector<16x48xf32>, vector<16x48xf32> -> vector<32x48xf32>
    %225 = arith.truncf %224 : vector<32x48xf32> to vector<32x48xbf16>
    %c0_58 = arith.constant 0 : index
    %c0_59 = arith.constant 0 : index
    %226 = vector.load %arg4[%c0_58, %c0_59] : memref<48x128xbf16, #tpu.memory_space<vmem>>, vector<48x128xbf16>
    %cst_60 = arith.constant dense<0.000000e+00> : vector<32x128xf32>
    %227 = tpu.matmul %225, %226, %cst_60 {dimension_numbers = #tpu.dot_dimension_numbers<[1], [0], [0], [1], [0, 0, 1, 1], [], []>} : vector<32x48xbf16>, vector<48x128xbf16>, vector<32x128xf32> -> vector<32x128xf32>
    %228 = vector.shape_cast %227 : vector<32x128xf32> to vector<2x16x128xf32>
    %c0_61 = arith.constant 0 : index
    %c0_62 = arith.constant 0 : index
    %c0_63 = arith.constant 0 : index
    %229 = vector.load %arg5[%c0_61, %c0_62, %c0_63] : memref<2x16x128xf32, #tpu.memory_space<vmem>>, vector<2x16x128xf32>
    tpu.vector_store %arg5[%c0_61, %c0_62, %c0_63], %228 {strides = array<i32>} : memref<2x16x128xf32, #tpu.memory_space<vmem>>, vector<2x16x128xf32>,
    return
  }
  func.func @transform_0(%arg0: i32) -> (i32, i32, i32) {
    %c0_i32 = arith.constant 0 : i32
    %c0_i32_0 = arith.constant 0 : i32
    %c0_i32_1 = arith.constant 0 : i32
    return %arg0, %c0_i32, %c0_i32_0 : i32, i32, i32
  }
  func.func @transform_1(%arg0: i32) -> (i32, i32, i32) {
    %c0_i32 = arith.constant 0 : i32
    %c0_i32_0 = arith.constant 0 : i32
    %c0_i32_1 = arith.constant 0 : i32
    return %arg0, %c0_i32, %c0_i32_0 : i32, i32, i32
  }
  func.func @transform_2(%arg0: i32) -> (i32, i32) {
    %c0_i32 = arith.constant 0 : i32
    %c0_i32_0 = arith.constant 0 : i32
    %c0_i32_1 = arith.constant 0 : i32
    return %c0_i32, %c0_i32_0 : i32, i32
  }
  func.func @transform_3(%arg0: i32) -> (i32, i32) {
    %c0_i32 = arith.constant 0 : i32
    %c0_i32_0 = arith.constant 0 : i32
    %c0_i32_1 = arith.constant 0 : i32
    return %c0_i32, %c0_i32_0 : i32, i32
  }
  func.func @transform_4(%arg0: i32) -> (i32, i32, i32) {
    %c0_i32 = arith.constant 0 : i32
    %c0_i32_0 = arith.constant 0 : i32
    %c0_i32_1 = arith.constant 0 : i32
    return %arg0, %c0_i32, %c0_i32_0 : i32, i32, i32
  }
}

</mosaic_0001>

<llo_original>
// kernel: tpu_custom_call.1
$region0: #{tpu_custom_call.1}
  #allocation0 [shape = 'u32[]', space=smem, size = 0x4, offset = 0x4, fixed_abs, tag = 'smem constant byte address 0x4 - core index']
  #allocation1 [shape = 'u32[72,128]{1,0:T(1,128)}', space=vmem, size = 0x9000, scoped, tag = 'internal scratch']
  %s0 = inlined_call_operand.vmem [shape: bf16[4,16,48], index: 0, kind: input, shape index: {}]
  %s1 = inlined_call_operand.vmem [shape: bf16[4,16,16], index: 1, kind: input, shape index: {}]
  %s2 = inlined_call_operand.vmem [shape: bf16[144,48], index: 2, kind: input, shape index: {}]
  %s3 = inlined_call_operand.vmem [shape: bf16[48,128], index: 3, kind: input, shape index: {}]
  %s4 = inlined_call_operand.hbm [shape: f32[4,16,128], index: 4, kind: output, shape index: {}]
  %s5 = sld [smem:[#allocation0]]
  $region49: #{tpu_custom_call.1} parent=0
    _
  %s7 = ssub.s32 1, %s5
  %s8 = scalar_select 0, %s7, %s5
  $region1: #{tpu_custom_call.1} parent=0
    #allocation2 [shape = 'u8[32768]{0}', space=vmem, size = 0x8000, scoped, tag = 'output window, operand 0']
    #allocation3 [shape = 's32[2]{0}', space=sflag, size = 0x8, scoped, tag = 'scoped memory for tpu_custom_call.1']
    %9 = vsyncpa [#allocation3], 0
    %s10 = scalar_lea.sflag [#allocation3], 1
    %11 = vsyncpa %s10, 0
    loop: start=0, step=1, limit=4
    $region2: #{tpu_custom_call.1} parent=1 // loop_pre_header
      _
    $region3: #{tpu_custom_call.1} parent=1 // loop_header
      %s13 = sphi 0, %s17
      %p14 = scmp.ge.s32.totalorder %s13, 4
      %s23 = sphi 0, %s25
      %s26 = sphi 0, %s23
      %s27 = sphi 0, %s26
      %s43 = sphi 0, %s27
      %s49 = sphi 0, %s51
      %s52 = sphi 0, %s49
      %s53 = sphi 0, %s52
      %s69 = sphi 0, %s53
      %s73 = sphi 0, %s73
      %s75 = sphi 0, %s73
      %s76 = sphi 0, %s75
      %s90 = sphi 0, %s76
      %s94 = sphi 0, %s94
      %s96 = sphi 0, %s94
      %s97 = sphi 0, %s96
      %s111 = sphi 0, %s97
      %s117 = sphi 0, %s119
      %s120 = sphi 0, %s117
      %s121 = sphi 0, %s120
      %s137 = sphi 0, %s121
    $region4: #{tpu_custom_call.1} parent=1 // loop_header_branch
      %16 = sbr.rel (%p14) target = $region8
    $region5: #{tpu_custom_call.1} parent=1 // loop_body
      %s18 = ssub.s32 %s13, 1
      %s19 = ssub.s32 %s13, 2
      %s20 = sadd.s32 %s13, 1
      %s21 = ssub.s32 %s13, %s20
      %p22 = scmp.eq.s32.totalorder %s21, 0
      %s24 = sadd.s32 %s23, 1
      %s25 = scalar_select %p22, %s23, %s24
      %p28 = pneg %p22
      %p29 = scmp.eq.s32.totalorder %s13, 1
      %p30 = por %p28, %p29
      %p31 = scmp.ne.s32.totalorder %s23, %s26
      %p32 = scmp.eq.s32.totalorder %s13, 0
      %p33 = por %p31, %p32
      %p34 = scmp.ne.s32.totalorder %s23, %s26
      %p35 = scmp.eq.s32.totalorder %s18, 1
      %p36 = por %p34, %p35
      %p37 = scmp.ne.s32.totalorder %s26, %s27
      %p38 = scmp.eq.s32.totalorder %s18, 0
      %p39 = por %p37, %p38
      %p40 = scmp.ne.s32.totalorder %s26, %s27
      %p41 = scmp.eq.s32.totalorder %s19, 1
      %p42 = por %p40, %p41
      %p44 = scmp.ne.s32.totalorder %s27, %s43
      %p45 = scmp.eq.s32.totalorder %s19, 0
      %p46 = por %p44, %p45
      %s47 = ssub.s32 %s13, %s20
      %p48 = scmp.eq.s32.totalorder %s47, 0
      %s50 = sadd.s32 %s49, 1
      %s51 = scalar_select %p48, %s49, %s50
      %p54 = pneg %p48
      %p55 = scmp.eq.s32.totalorder %s13, 1
      %p56 = por %p54, %p55
      %p57 = scmp.ne.s32.totalorder %s49, %s52
      %p58 = scmp.eq.s32.totalorder %s13, 0
      %p59 = por %p57, %p58
      %p60 = scmp.ne.s32.totalorder %s49, %s52
      %p61 = scmp.eq.s32.totalorder %s18, 1
      %p62 = por %p60, %p61
      %p63 = scmp.ne.s32.totalorder %s52, %s53
      %p64 = scmp.eq.s32.totalorder %s18, 0
      %p65 = por %p63, %p64
      %p66 = scmp.ne.s32.totalorder %s52, %s53
      %p67 = scmp.eq.s32.totalorder %s19, 1
      %p68 = por %p66, %p67
      %p70 = scmp.ne.s32.totalorder %s53, %s69
      %p71 = scmp.eq.s32.totalorder %s19, 0
      %p72 = por %p70, %p71
      %s74 = sadd.s32 %s73, 1
      %p77 = scmp.eq.s32.totalorder %s13, 1
      %p78 = scmp.ne.s32.totalorder %s73, %s75
      %p79 = scmp.eq.s32.totalorder %s13, 0
      %p80 = por %p78, %p79
      %p81 = scmp.ne.s32.totalorder %s73, %s75
      %p82 = scmp.eq.s32.totalorder %s18, 1
      %p83 = por %p81, %p82
      %p84 = scmp.ne.s32.totalorder %s75, %s76
      %p85 = scmp.eq.s32.totalorder %s18, 0
      %p86 = por %p84, %p85
      %p87 = scmp.ne.s32.totalorder %s75, %s76
      %p88 = scmp.eq.s32.totalorder %s19, 1
      %p89 = por %p87, %p88
      %p91 = scmp.ne.s32.totalorder %s76, %s90
      %p92 = scmp.eq.s32.totalorder %s19, 0
      %p93 = por %p91, %p92
      %s95 = sadd.s32 %s94, 1
      %p98 = scmp.eq.s32.totalorder %s13, 1
      %p99 = scmp.ne.s32.totalorder %s94, %s96
      %p100 = scmp.eq.s32.totalorder %s13, 0
      %p101 = por %p99, %p100
      %p102 = scmp.ne.s32.totalorder %s94, %s96
      %p103 = scmp.eq.s32.totalorder %s18, 1
      %p104 = por %p102, %p103
      %p105 = scmp.ne.s32.totalorder %s96, %s97
      %p106 = scmp.eq.s32.totalorder %s18, 0
      %p107 = por %p105, %p106
      %p108 = scmp.ne.s32.totalorder %s96, %s97
      %p109 = scmp.eq.s32.totalorder %s19, 1
      %p110 = por %p108, %p109
      %p112 = scmp.ne.s32.totalorder %s97, %s111
      %p113 = scmp.eq.s32.totalorder %s19, 0
      %p114 = por %p112, %p113
      %s115 = ssub.s32 %s13, %s20
      %p116 = scmp.eq.s32.totalorder %s115, 0
      %s118 = sadd.s32 %s117, 1
      %s119 = scalar_select %p116, %s117, %s118
      %p122 = pneg %p116
      %p123 = scmp.eq.s32.totalorder %s13, 1
      %p124 = por %p122, %p123
      %p125 = scmp.ne.s32.totalorder %s117, %s120
      %p126 = scmp.eq.s32.totalorder %s13, 0
      %p127 = por %p125, %p126
      %p128 = scmp.ne.s32.totalorder %s117, %s120
      %p129 = scmp.eq.s32.totalorder %s18, 1
      %p130 = por %p128, %p129
      %p131 = scmp.ne.s32.totalorder %s120, %s121
      %p132 = scmp.eq.s32.totalorder %s18, 0
      %p133 = por %p131, %p132
      %p134 = scmp.ne.s32.totalorder %s120, %s121
      %p135 = scmp.eq.s32.totalorder %s19, 1
      %p136 = por %p134, %p135
      %p138 = scmp.ne.s32.totalorder %s121, %s137
      %p139 = scmp.eq.s32.totalorder %s19, 0
      %p140 = por %p138, %p139
      %p141 = scmp.le.s32.totalorder 1, %s13
      %p142 = scmp.lt.s32.totalorder %s13, 3
      %p143 = pnand %p141, %p142
      %p144 = pneg %p143
      // Predicated region
      $region9: #{tpu_custom_call.1} parent=5 // pred_check
        _
      $region10: #{tpu_custom_call.1} parent=5 // pred_check_branch
        %146 = sbr.rel (%p143) target = $region12
      $region11: #{tpu_custom_call.1} parent=5 // pred_region
        %s147 = ssub.s32 %s13, 1
        // Predicated region
        $region13: #{tpu_custom_call.1} parent=11 // pred_check
          %p148 = pneg %p86
        $region14: #{tpu_custom_call.1} parent=11 // pred_check_branch
          %150 = sbr.rel (%p148) target = $region16
        $region15: #{tpu_custom_call.1} parent=11 // pred_region
          _
        $region16: #{tpu_custom_call.1} parent=11 // pred_fallthru
          _
        // Predicated region
        $region17: #{tpu_custom_call.1} parent=11 // pred_check
          %p151 = pneg %p107
        $region18: #{tpu_custom_call.1} parent=11 // pred_check_branch
          %153 = sbr.rel (%p151) target = $region20
        $region19: #{tpu_custom_call.1} parent=11 // pred_region
          _
        $region20: #{tpu_custom_call.1} parent=11 // pred_fallthru
          _
      $region12: #{tpu_custom_call.1} parent=5 // pred_fallthru
        _
      %p154 = scmp.lt.s32.totalorder %s13, 2
      // Predicated region
      $region21: #{tpu_custom_call.1} parent=5 // pred_check
        %p155 = pneg %p154
      $region22: #{tpu_custom_call.1} parent=5 // pred_check_branch
        %157 = sbr.rel (%p155) target = $region24
      $region23: #{tpu_custom_call.1} parent=5 // pred_region
        // Predicated region
        $region25: #{tpu_custom_call.1} parent=23 // pred_check
          %p158 = pneg %p33
        $region26: #{tpu_custom_call.1} parent=23 // pred_check_branch
          %160 = sbr.rel (%p158) target = $region28
        $region27: #{tpu_custom_call.1} parent=23 // pred_region
          %s161 = smul.u32 2, %s13
          %p162 = scmp.lt.s32.totalorder %s161, 3
          %s163 = scalar_select %p162, %s161, 3
          %s164 = smul.addr %s163, 2
          %s165 = smul.addr %s164, 4
          %s166 = scalar_lea.vmem %s0, %s165
          %s167 = smul.u32 2, %s13
        $region28: #{tpu_custom_call.1} parent=23 // pred_fallthru
          _
        // Predicated region
        $region29: #{tpu_custom_call.1} parent=23 // pred_check
          %p168 = pneg %p59
        $region30: #{tpu_custom_call.1} parent=23 // pred_check_branch
          %170 = sbr.rel (%p168) target = $region32
        $region31: #{tpu_custom_call.1} parent=23 // pred_region
          %s171 = smul.u32 2, %s13
          %p172 = scmp.lt.s32.totalorder %s171, 3
          %s173 = scalar_select %p172, %s171, 3
          %s174 = smul.addr %s173, 2
          %s175 = smul.addr %s174, 4
          %s176 = scalar_lea.vmem %s1, %s175
          %s177 = smul.u32 2, %s13
        $region32: #{tpu_custom_call.1} parent=23 // pred_fallthru
          _
      $region24: #{tpu_custom_call.1} parent=5 // pred_fallthru
        _
      %p178 = scmp.le.s32.totalorder 1, %s13
      %p179 = scmp.lt.s32.totalorder %s13, 3
      %p180 = pnand %p178, %p179
      %p181 = pneg %p180
      // Predicated region
      $region33: #{tpu_custom_call.1} parent=5 // pred_check
        _
      $region34: #{tpu_custom_call.1} parent=5 // pred_check_branch
        %183 = sbr.rel (%p180) target = $region36
      $region35: #{tpu_custom_call.1} parent=5 // pred_region
        %s184 = ssub.s32 %s13, 1
        %s185 = smul.u32 2, %s18
        %p186 = scmp.lt.s32.totalorder %s185, 3
        %s187 = scalar_select %p186, %s185, 3
        %s188 = smul.addr %s187, 2
        %s189 = smul.addr %s188, 4
        %s190 = scalar_lea.vmem %s0, %s189
        %p191 = pneg %p39
        %p192 = pneg %p36
        %s193 = smul.u32 2, %s18
        %p194 = scmp.lt.s32.totalorder %s193, 3
        %s195 = scalar_select %p194, %s193, 3
        %s196 = smul.addr %s195, 2
        %s197 = smul.addr %s196, 4
        %s198 = scalar_lea.vmem %s1, %s197
        %p199 = pneg %p65
        %p200 = pneg %p62
        %p201 = pneg %p86
        %p202 = pneg %p83
        %p203 = pneg %p107
        %p204 = pneg %p104
        %p205 = pneg %p133
        %p206 = pneg %p130
        %s207 = sand.u32 %s120, 1
        %s208 = scalar_lea.sflag [#allocation3], %s207
        %s209 = sand.u32 %s120, 1
        %s210 = smul.addr %s209, 32
        %s211 = scalar_lea.vmem [#allocation2], %s210
        %s212 = smul.u32 2, %s18
        %p213 = scmp.lt.s32.totalorder %s212, 3
        %s214 = scalar_select %p213, %s212, 3
        %s215 = smul.addr %s214, 2
        %s216 = smul.addr %s215, 4
        %s217 = scalar_lea.vmem %s0, %s216
        %s218 = smul.u32 2, %s18
        %s219 = smul.u32 2, %s18
        %p220 = scmp.lt.s32.totalorder %s219, 3
        %s221 = scalar_select %p220, %s219, 3
        %s222 = smul.addr %s221, 2
        %s223 = smul.addr %s222, 4
        %s224 = scalar_lea.vmem %s1, %s223
        %s225 = smul.u32 2, %s18
        %s226 = smul.u32 2, %s18
        %v228 = vld [vmem:[%s217] sm:$0xf]
        %v229 = vld [vmem:[%s217 + $0x4] sm:$0xf]
        %v230 = vld [vmem:[%s217 + $0x8] sm:$0xf]
        %v231 = vld [vmem:[%s217 + $0xc] sm:$0xf]
        %v232 = vld [vmem:[%s2] sm:$0xf]
        %v233 = vld [vmem:[%s2 + $0x4] sm:$0xf]
        %v234 = vld [vmem:[%s2 + $0x8] sm:$0xf]
        %v235 = vld [vmem:[%s2 + $0xc] sm:$0xf]
        %v236 = vld [vmem:[%s2 + $0x10] sm:$0xf]
        %v237 = vld [vmem:[%s2 + $0x14] sm:$0xf]
        %v238 = vld [vmem:[%s2 + $0x18] sm:$0xf]
        %v239 = vld [vmem:[%s2 + $0x1c] sm:$0xf]
        %v240 = vld [vmem:[%s2 + $0x20] sm:$0xf]
        %v241 = vld [vmem:[%s2 + $0x24] sm:$0xf]
        %v242 = vld [vmem:[%s2 + $0x28] sm:$0xf]
        %v243 = vld [vmem:[%s2 + $0x2c] sm:$0xf]
        %v244 = vld [vmem:[%s2 + $0x30] sm:$0xf]
        %v245 = vld [vmem:[%s2 + $0x34] sm:$0xf]
        %v246 = vld [vmem:[%s2 + $0x38] sm:$0xf]
        %v247 = vld [vmem:[%s2 + $0x3c] sm:$0xf]
        %v248 = vld [vmem:[%s2 + $0x40] sm:$0xf]
        %v249 = vld [vmem:[%s2 + $0x44] sm:$0xf]
        %v254 = vunpack.c.l.b16 %v228
        %v255 = vunpack.c.l.b16 %v229
        %v256 = vunpack.c.l.b16 %v230
        %v257 = vunpack.c.l.b16 %v231
        %v258 = vpack.c.b16 %v255, %v254
        %v259 = vpack.c.b16 %v257, %v256
        %v278 = vunpack.c.l.b16 %v232
        %v279 = vunpack.c.l.b16 %v233
        %v280 = vunpack.c.l.b16 %v234
        %v281 = vunpack.c.l.b16 %v235
        %v282 = vunpack.c.l.b16 %v236
        %v283 = vunpack.c.l.b16 %v237
        %v284 = vunpack.c.l.b16 %v238
        %v285 = vunpack.c.l.b16 %v239
        %v286 = vunpack.c.l.b16 %v240
        %v287 = vunpack.c.l.b16 %v241
        %v288 = vunpack.c.l.b16 %v242
        %v289 = vunpack.c.l.b16 %v243
        %v290 = vunpack.c.l.b16 %v244
        %v291 = vunpack.c.l.b16 %v245
        %v292 = vunpack.c.l.b16 %v246
        %v293 = vunpack.c.l.b16 %v247
        %v294 = vunpack.c.l.b16 %v248
        %v295 = vunpack.c.l.b16 %v249
        %v296 = vpack.c.b16 %v279, %v278
        %v297 = vpack.c.b16 %v281, %v280
        %v298 = vpack.c.b16 %v283, %v282
        %v299 = vpack.c.b16 %v285, %v284
        %v300 = vpack.c.b16 %v287, %v286
        %v301 = vpack.c.b16 %v289, %v288
        %v302 = vpack.c.b16 %v291, %v290
        %v303 = vpack.c.b16 %v293, %v292
        %v304 = vpack.c.b16 %v295, %v294
        %vm305 = vcmask 392192
        %v307 = vsel %vm305, %v258, 0
        %v310 = vsel %vm305, %v259, 0
        %v313 = vsel %vm305, %v296, 0
        %v316 = vsel %vm305, %v297, 0
        %v319 = vsel %vm305, %v298, 0
        %v322 = vsel %vm305, %v299, 0
        %v325 = vsel %vm305, %v300, 0
        %v328 = vsel %vm305, %v301, 0
        %v331 = vsel %vm305, %v302, 0
        %v334 = vsel %vm305, %v303, 0
        %v337 = vsel %vm305, %v304, 0
        %339 = vmatpush.bf16.xpose.msra.mxu0 %v334
        %340 = vmatpush.bf16.xpose.msra.mxu0 %v331
        %341 = vmatpush.bf16.xpose.msra.mxu0 %v328
        %342 = vmatpush.bf16.xpose.msra.mxu0 %v325
        %343 = vmatpush.bf16.xpose.msra.mxu0 %v322
        %344 = vmatpush.bf16.xpose.msra.mxu0 %v319
        %345 = vmatpush.bf16.xpose.msra.mxu0 %v316
        %346 = vmatpush.bf16.xpose.msra.mxu0 %v313
        %347 = vmatmul.bf16.gmra.mxu0 %v307
        %v348 = vpop.f32.mrf.mxu0
        %v349 = vadd.f32 0.0, %v348
        %v350 = vpop.f32.mrf.mxu0
        %v351 = vadd.f32 0.0, %v350
        %352 = vmatmul.bf16.gmra.mxu0 %v310
        %v353 = vpop.f32.mrf.mxu0
        %v354 = vadd.f32 0.0, %v353
        %v355 = vpop.f32.mrf.mxu0
        %v356 = vadd.f32 0.0, %v355
        %357 = vdwg.mxu0
        %358 = vmatpush.bf16.xpose.msra.mxu0 0
        %359 = vmatpush.bf16.xpose.msra.mxu0 0
        %360 = vmatpush.bf16.xpose.msra.mxu0 0
        %361 = vmatpush.bf16.xpose.msra.mxu0 0
        %362 = vmatpush.bf16.xpose.msra.mxu0 0
        %363 = vmatpush.bf16.xpose.msra.mxu0 0
        %364 = vmatpush.bf16.xpose.msra.mxu0 0
        %365 = vmatpush.bf16.xpose.msra.mxu0 %v337
        %366 = vmatmul.bf16.gmra.mxu0 %v307
        %v367 = vpop.f32.mrf.mxu0
        %v368 = vadd.f32 0.0, %v367
        %v369 = vpop.f32.mrf.mxu0
        %v370 = vadd.f32 0.0, %v369
        %371 = vmatmul.bf16.gmra.mxu0 %v310
        %v372 = vpop.f32.mrf.mxu0
        %v373 = vadd.f32 0.0, %v372
        %v374 = vpop.f32.mrf.mxu0
        %v375 = vadd.f32 0.0, %v374
        %376 = vdwg.mxu0
        %v377 = vmul.f32 %v349, 0.35355338
        %v378 = vmul.f32 %v351, 0.35355338
        %v379 = vmul.f32 %v354, 0.35355338
        %v380 = vmul.f32 %v356, 0.35355338
        %v381 = vpack.c.bf16 %v377, %v377
        %v382 = vpack.c.bf16 %v378, %v378
        %v383 = vpack.c.bf16 %v379, %v379
        %v384 = vpack.c.bf16 %v380, %v380
        %v385 = vpack.c.bf16 %v349, %v349
        %v386 = vpack.c.bf16 %v351, %v351
        %v387 = vpack.c.bf16 %v354, %v354
        %v388 = vpack.c.bf16 %v356, %v356
        %v389 = vpack.c.bf16 %v368, %v349
        %v390 = vpack.c.bf16 %v370, %v351
        %v391 = vpack.c.bf16 %v373, %v354
        %v392 = vpack.c.bf16 %v375, %v356
        %v393 = vld [vmem:[%s224] sm:$0xf]
        %v394 = vld [vmem:[%s224 + $0x4] sm:$0xf]
        %v395 = vunpack.c.l.bf16 %v393
        %v396 = vunpack.c.l.bf16 %v394
        %v399 = vunpack.c.l.b16 %v381
        %v400 = vunpack.c.l.b16 %v382
        %v401 = vpack.c.b16 %v400, %v399
        %v404 = vunpack.c.l.b16 %v385
        %v405 = vunpack.c.l.b16 %v386
        %v406 = vpack.c.b16 %v405, %v404
        %407 = vrot.lane.b32.xlu0 %v406, 80
        %v408 = vpop.permute.xlu0 %407
        %vm409 = vcmask 64512
        %v411 = vsel %vm409, %v401, 0
        %v414 = vsel %vm409, %v408, 0
        %416 = vmatpush.bf16.xpose.msra.mxu0 0
        %417 = vmatpush.bf16.xpose.msra.mxu0 0
        %418 = vmatpush.bf16.xpose.msra.mxu0 0
        %419 = vmatpush.bf16.xpose.msra.mxu0 0
        %420 = vmatpush.bf16.xpose.msra.mxu0 0
        %421 = vmatpush.bf16.xpose.msra.mxu0 0
        %422 = vmatpush.bf16.xpose.msra.mxu0 0
        %423 = vmatpush.bf16.xpose.msra.mxu0 %v414
        %424 = vmatmul.bf16.gmra.mxu0 %v411
        %v425 = vpop.f32.mrf.mxu0
        %v426 = vadd.f32 0.0, %v425
        %v427 = vpop.f32.mrf.mxu0
        %v428 = vadd.f32 0.0, %v427
        %429 = vdwg.mxu0
        %v430 = vmul.f32 %v395, %v426
        %v431 = vmul.f32 %v396, %v428
        %vm432 = vcmask 130048
        %v433 = vsel %vm432, %v430, -inf
        %434 = vmax.xlane.f32.xlu0 %v433
        %v435 = vpop.xlane.xlu0 %434
        %v436 = vsel %vm432, %v431, -inf
        %437 = vmax.xlane.f32.xlu0 %v436
        %v438 = vpop.xlane.xlu0 %437
        %v439 = vsub.f32 %v430, %v435
        %v440 = vsub.f32 %v431, %v438
        %v441 = vmul.f32 %v439, 1.442695
        %v442 = vpow.pop %v441
        %v443 = vmul.f32 %v440, 1.442695
        %v444 = vpow.pop %v443
        %v445 = vsel %vm432, %v442, 0.0
        %446 = vadd.xlane.f32.xlu0 %v445
        %v447 = vpop.xlane.xlu0 %446
        %v448 = vsel %vm432, %v444, 0.0
        %449 = vadd.xlane.f32.xlu0 %v448
        %v450 = vpop.xlane.xlu0 %449
        %v451 = vrcp.pop %v447
        %v452 = vrcp.pop %v450
        %v453 = vmul.f32 %v442, %v451
        %v454 = vmul.f32 %v444, %v452
        %v455 = vpack.c.bf16 %v454, %v453
        %v458 = vunpack.c.l.b16 %v389
        %v459 = vunpack.c.l.b16 %v390
        %v460 = vpack.c.b16 %v459, %v458
        %461 = vrot.lane.b32.xlu0 %v460, 32
        %v462 = vpop.permute.xlu0 %461
        %v465 = vsel %vm432, %v455, 0
        %467 = vmatpush.bf16.msra.mxu0 0
        %468 = vmatpush.bf16.msra.mxu0 0
        %469 = vmatpush.bf16.msra.mxu0 0
        %470 = vmatpush.bf16.msra.mxu0 0
        %471 = vmatpush.bf16.msra.mxu0 0
        %472 = vmatpush.bf16.msra.mxu0 0
        %473 = vmatpush.bf16.msra.mxu0 0
        %474 = vmatpush.bf16.msra.mxu0 %v462
        %475 = vmatmul.bf16.gmra.mxu0 %v465
        %v476 = vpop.f32.mrf.mxu0
        %v477 = vadd.f32 0.0, %v476
        %v478 = vpop.f32.mrf.mxu0
        %v479 = vadd.f32 0.0, %v478
        %480 = vdwg.mxu0
        %481 = vrot.lane.b32.xlu0 %v401, 120
        %v482 = vpop.permute.xlu0 %481
        %483 = vrot.lane.b32.xlu0 %v406, 72
        %v484 = vpop.permute.xlu0 %483
        %v486 = vsel %vm409, %v482, 0
        %v489 = vsel %vm409, %v484, 0
        %491 = vmatpush.bf16.xpose.msra.mxu0 0
        %492 = vmatpush.bf16.xpose.msra.mxu0 0
        %493 = vmatpush.bf16.xpose.msra.mxu0 0
        %494 = vmatpush.bf16.xpose.msra.mxu0 0
        %495 = vmatpush.bf16.xpose.msra.mxu0 0
        %496 = vmatpush.bf16.xpose.msra.mxu0 0
        %497 = vmatpush.bf16.xpose.msra.mxu0 0
        %498 = vmatpush.bf16.xpose.msra.mxu0 %v489
        %499 = vmatmul.bf16.gmra.mxu0 %v486
        %v500 = vpop.f32.mrf.mxu0
        %v501 = vadd.f32 0.0, %v500
        %v502 = vpop.f32.mrf.mxu0
        %v503 = vadd.f32 0.0, %v502
        %504 = vdwg.mxu0
        %v505 = vmul.f32 %v395, %v501
        %v506 = vmul.f32 %v396, %v503
        %v507 = vsel %vm432, %v505, -inf
        %508 = vmax.xlane.f32.xlu0 %v507
        %v509 = vpop.xlane.xlu0 %508
        %v510 = vsel %vm432, %v506, -inf
        %511 = vmax.xlane.f32.xlu0 %v510
        %v512 = vpop.xlane.xlu0 %511
        %v513 = vsub.f32 %v505, %v509
        %v514 = vsub.f32 %v506, %v512
        %v515 = vmul.f32 %v513, 1.442695
        %v516 = vpow.pop %v515
        %v517 = vmul.f32 %v514, 1.442695
        %v518 = vpow.pop %v517
        %v519 = vsel %vm432, %v516, 0.0
        %520 = vadd.xlane.f32.xlu0 %v519
        %v521 = vpop.xlane.xlu0 %520
        %v522 = vsel %vm432, %v518, 0.0
        %523 = vadd.xlane.f32.xlu0 %v522
        %v524 = vpop.xlane.xlu0 %523
        %v525 = vrcp.pop %v521
        %v526 = vrcp.pop %v524
        %v527 = vmul.f32 %v516, %v525
        %v528 = vmul.f32 %v518, %v526
        %v529 = vpack.c.bf16 %v528, %v527
        %530 = vrot.lane.b32.xlu0 %v460, 24
        %v531 = vpop.permute.xlu0 %530
        %v534 = vsel %vm432, %v529, 0
        %536 = vmatpush.bf16.msra.mxu0 0
        %537 = vmatpush.bf16.msra.mxu0 0
        %538 = vmatpush.bf16.msra.mxu0 0
        %539 = vmatpush.bf16.msra.mxu0 0
        %540 = vmatpush.bf16.msra.mxu0 0
        %541 = vmatpush.bf16.msra.mxu0 0
        %542 = vmatpush.bf16.msra.mxu0 0
        %543 = vmatpush.bf16.msra.mxu0 %v531
        %544 = vmatmul.bf16.gmra.mxu0 %v534
        %v545 = vpop.f32.mrf.mxu0
        %v546 = vadd.f32 0.0, %v545
        %v547 = vpop.f32.mrf.mxu0
        %v548 = vadd.f32 0.0, %v547
        %549 = vdwg.mxu0
        %550 = vrot.lane.b32.xlu0 %v401, 112
        %v551 = vpop.permute.xlu0 %550
        %552 = vrot.lane.b32.xlu0 %v406, 64
        %v553 = vpop.permute.xlu0 %552
        %v555 = vsel %vm409, %v551, 0
        %v558 = vsel %vm409, %v553, 0
        %560 = vmatpush.bf16.xpose.msra.mxu0 0
        %561 = vmatpush.bf16.xpose.msra.mxu0 0
        %562 = vmatpush.bf16.xpose.msra.mxu0 0
        %563 = vmatpush.bf16.xpose.msra.mxu0 0
        %564 = vmatpush.bf16.xpose.msra.mxu0 0
        %565 = vmatpush.bf16.xpose.msra.mxu0 0
        %566 = vmatpush.bf16.xpose.msra.mxu0 0
        %567 = vmatpush.bf16.xpose.msra.mxu0 %v558
        %568 = vmatmul.bf16.gmra.mxu0 %v555
        %v569 = vpop.f32.mrf.mxu0
        %v570 = vadd.f32 0.0, %v569
        %v571 = vpop.f32.mrf.mxu0
        %v572 = vadd.f32 0.0, %v571
        %573 = vdwg.mxu0
        %v574 = vmul.f32 %v395, %v570
        %v575 = vmul.f32 %v396, %v572
        %v576 = vsel %vm432, %v574, -inf
        %577 = vmax.xlane.f32.xlu0 %v576
        %v578 = vpop.xlane.xlu0 %577
        %v579 = vsel %vm432, %v575, -inf
        %580 = vmax.xlane.f32.xlu0 %v579
        %v581 = vpop.xlane.xlu0 %580
        %v582 = vsub.f32 %v574, %v578
        %v583 = vsub.f32 %v575, %v581
        %v584 = vmul.f32 %v582, 1.442695
        %v585 = vpow.pop %v584
        %v586 = vmul.f32 %v583, 1.442695
        %v587 = vpow.pop %v586
        %v588 = vsel %vm432, %v585, 0.0
        %589 = vadd.xlane.f32.xlu0 %v588
        %v590 = vpop.xlane.xlu0 %589
        %v591 = vsel %vm432, %v587, 0.0
        %592 = vadd.xlane.f32.xlu0 %v591
        %v593 = vpop.xlane.xlu0 %592
        %v594 = vrcp.pop %v590
        %v595 = vrcp.pop %v593
        %v596 = vmul.f32 %v585, %v594
        %v597 = vmul.f32 %v587, %v595
        %v598 = vpack.c.bf16 %v597, %v596
        %599 = vrot.lane.b32.xlu0 %v460, 16
        %v600 = vpop.permute.xlu0 %599
        %v603 = vsel %vm432, %v598, 0
        %605 = vmatpush.bf16.msra.mxu0 0
        %606 = vmatpush.bf16.msra.mxu0 0
        %607 = vmatpush.bf16.msra.mxu0 0
        %608 = vmatpush.bf16.msra.mxu0 0
        %609 = vmatpush.bf16.msra.mxu0 0
        %610 = vmatpush.bf16.msra.mxu0 0
        %611 = vmatpush.bf16.msra.mxu0 0
        %612 = vmatpush.bf16.msra.mxu0 %v600
        %613 = vmatmul.bf16.gmra.mxu0 %v603
        %v614 = vpop.f32.mrf.mxu0
        %v615 = vadd.f32 0.0, %v614
        %v616 = vpop.f32.mrf.mxu0
        %v617 = vadd.f32 0.0, %v616
        %618 = vdwg.mxu0
        %619 = vrot.lane.b32.xlu0 %v401, 104
        %v620 = vpop.permute.xlu0 %619
        %621 = vrot.lane.b32.xlu0 %v406, 56
        %v622 = vpop.permute.xlu0 %621
        %v624 = vsel %vm409, %v620, 0
        %v627 = vsel %vm409, %v622, 0
        %629 = vmatpush.bf16.xpose.msra.mxu0 0
        %630 = vmatpush.bf16.xpose.msra.mxu0 0
        %631 = vmatpush.bf16.xpose.msra.mxu0 0
        %632 = vmatpush.bf16.xpose.msra.mxu0 0
        %633 = vmatpush.bf16.xpose.msra.mxu0 0
        %634 = vmatpush.bf16.xpose.msra.mxu0 0
        %635 = vmatpush.bf16.xpose.msra.mxu0 0
        %636 = vmatpush.bf16.xpose.msra.mxu0 %v627
        %637 = vmatmul.bf16.gmra.mxu0 %v624
        %v638 = vpop.f32.mrf.mxu0
        %v639 = vadd.f32 0.0, %v638
        %v640 = vpop.f32.mrf.mxu0
        %v641 = vadd.f32 0.0, %v640
        %642 = vdwg.mxu0
        %v643 = vmul.f32 %v395, %v639
        %v644 = vmul.f32 %v396, %v641
        %v645 = vsel %vm432, %v643, -inf
        %646 = vmax.xlane.f32.xlu0 %v645
        %v647 = vpop.xlane.xlu0 %646
        %v648 = vsel %vm432, %v644, -inf
        %649 = vmax.xlane.f32.xlu0 %v648
        %v650 = vpop.xlane.xlu0 %649
        %v651 = vsub.f32 %v643, %v647
        %v652 = vsub.f32 %v644, %v650
        %v653 = vmul.f32 %v651, 1.442695
        %v654 = vpow.pop %v653
        %v655 = vmul.f32 %v652, 1.442695
        %v656 = vpow.pop %v655
        %v657 = vsel %vm432, %v654, 0.0
        %658 = vadd.xlane.f32.xlu0 %v657
        %v659 = vpop.xlane.xlu0 %658
        %v660 = vsel %vm432, %v656, 0.0
        %661 = vadd.xlane.f32.xlu0 %v660
        %v662 = vpop.xlane.xlu0 %661
        %v663 = vrcp.pop %v659
        %v664 = vrcp.pop %v662
        %v665 = vmul.f32 %v654, %v663
        %v666 = vmul.f32 %v656, %v664
        %v667 = vpack.c.bf16 %v666, %v665
        %668 = vrot.lane.b32.xlu0 %v460, 8
        %v669 = vpop.permute.xlu0 %668
        %v672 = vsel %vm432, %v667, 0
        %674 = vmatpush.bf16.msra.mxu0 0
        %675 = vmatpush.bf16.msra.mxu0 0
        %676 = vmatpush.bf16.msra.mxu0 0
        %677 = vmatpush.bf16.msra.mxu0 0
        %678 = vmatpush.bf16.msra.mxu0 0
        %679 = vmatpush.bf16.msra.mxu0 0
        %680 = vmatpush.bf16.msra.mxu0 0
        %681 = vmatpush.bf16.msra.mxu0 %v669
        %682 = vmatmul.bf16.gmra.mxu0 %v672
        %v683 = vpop.f32.mrf.mxu0
        %v684 = vadd.f32 0.0, %v683
        %v685 = vpop.f32.mrf.mxu0
        %v686 = vadd.f32 0.0, %v685
        %687 = vdwg.mxu0
        %688 = vrot.lane.b32.xlu0 %v401, 96
        %v689 = vpop.permute.xlu0 %688
        %690 = vrot.lane.b32.xlu0 %v406, 48
        %v691 = vpop.permute.xlu0 %690
        %v693 = vsel %vm409, %v689, 0
        %v696 = vsel %vm409, %v691, 0
        %698 = vmatpush.bf16.xpose.msra.mxu0 0
        %699 = vmatpush.bf16.xpose.msra.mxu0 0
        %700 = vmatpush.bf16.xpose.msra.mxu0 0
        %701 = vmatpush.bf16.xpose.msra.mxu0 0
        %702 = vmatpush.bf16.xpose.msra.mxu0 0
        %703 = vmatpush.bf16.xpose.msra.mxu0 0
        %704 = vmatpush.bf16.xpose.msra.mxu0 0
        %705 = vmatpush.bf16.xpose.msra.mxu0 %v696
        %706 = vmatmul.bf16.gmra.mxu0 %v693
        %v707 = vpop.f32.mrf.mxu0
        %v708 = vadd.f32 0.0, %v707
        %v709 = vpop.f32.mrf.mxu0
        %v710 = vadd.f32 0.0, %v709
        %711 = vdwg.mxu0
        %v712 = vmul.f32 %v395, %v708
        %v713 = vmul.f32 %v396, %v710
        %v714 = vsel %vm432, %v712, -inf
        %715 = vmax.xlane.f32.xlu0 %v714
        %v716 = vpop.xlane.xlu0 %715
        %v717 = vsel %vm432, %v713, -inf
        %718 = vmax.xlane.f32.xlu0 %v717
        %v719 = vpop.xlane.xlu0 %718
        %v720 = vsub.f32 %v712, %v716
        %v721 = vsub.f32 %v713, %v719
        %v722 = vmul.f32 %v720, 1.442695
        %v723 = vpow.pop %v722
        %v724 = vmul.f32 %v721, 1.442695
        %v725 = vpow.pop %v724
        %v726 = vsel %vm432, %v723, 0.0
        %727 = vadd.xlane.f32.xlu0 %v726
        %v728 = vpop.xlane.xlu0 %727
        %v729 = vsel %vm432, %v725, 0.0
        %730 = vadd.xlane.f32.xlu0 %v729
        %v731 = vpop.xlane.xlu0 %730
        %v732 = vrcp.pop %v728
        %v733 = vrcp.pop %v731
        %v734 = vmul.f32 %v723, %v732
        %v735 = vmul.f32 %v725, %v733
        %v736 = vpack.c.bf16 %v735, %v734
        %v737 = vunpack.c.h.b16 %v389
        %v738 = vunpack.c.h.b16 %v390
        %v739 = vpack.c.b16 %v738, %v737
        %v742 = vsel %vm432, %v736, 0
        %744 = vmatpush.bf16.msra.mxu0 0
        %745 = vmatpush.bf16.msra.mxu0 0
        %746 = vmatpush.bf16.msra.mxu0 0
        %747 = vmatpush.bf16.msra.mxu0 0
        %748 = vmatpush.bf16.msra.mxu0 0
        %749 = vmatpush.bf16.msra.mxu0 0
        %750 = vmatpush.bf16.msra.mxu0 0
        %751 = vmatpush.bf16.msra.mxu0 %v739
        %752 = vmatmul.bf16.gmra.mxu0 %v742
        %v753 = vpop.f32.mrf.mxu0
        %v754 = vadd.f32 0.0, %v753
        %v755 = vpop.f32.mrf.mxu0
        %v756 = vadd.f32 0.0, %v755
        %757 = vdwg.mxu0
        %758 = vrot.lane.b32.xlu0 %v401, 88
        %v759 = vpop.permute.xlu0 %758
        %760 = vrot.lane.b32.xlu0 %v406, 40
        %v761 = vpop.permute.xlu0 %760
        %v763 = vsel %vm409, %v759, 0
        %v766 = vsel %vm409, %v761, 0
        %768 = vmatpush.bf16.xpose.msra.mxu0 0
        %769 = vmatpush.bf16.xpose.msra.mxu0 0
        %770 = vmatpush.bf16.xpose.msra.mxu0 0
        %771 = vmatpush.bf16.xpose.msra.mxu0 0
        %772 = vmatpush.bf16.xpose.msra.mxu0 0
        %773 = vmatpush.bf16.xpose.msra.mxu0 0
        %774 = vmatpush.bf16.xpose.msra.mxu0 0
        %775 = vmatpush.bf16.xpose.msra.mxu0 %v766
        %776 = vmatmul.bf16.gmra.mxu0 %v763
        %v777 = vpop.f32.mrf.mxu0
        %v778 = vadd.f32 0.0, %v777
        %v779 = vpop.f32.mrf.mxu0
        %v780 = vadd.f32 0.0, %v779
        %781 = vdwg.mxu0
        %v782 = vmul.f32 %v395, %v778
        %v783 = vmul.f32 %v396, %v780
        %v784 = vsel %vm432, %v782, -inf
        %785 = vmax.xlane.f32.xlu0 %v784
        %v786 = vpop.xlane.xlu0 %785
        %v787 = vsel %vm432, %v783, -inf
        %788 = vmax.xlane.f32.xlu0 %v787
        %v789 = vpop.xlane.xlu0 %788
        %v790 = vsub.f32 %v782, %v786
        %v791 = vsub.f32 %v783, %v789
        %v792 = vmul.f32 %v790, 1.442695
        %v793 = vpow.pop %v792
        %v794 = vmul.f32 %v791, 1.442695
        %v795 = vpow.pop %v794
        %v796 = vsel %vm432, %v793, 0.0
        %797 = vadd.xlane.f32.xlu0 %v796
        %v798 = vpop.xlane.xlu0 %797
        %v799 = vsel %vm432, %v795, 0.0
        %800 = vadd.xlane.f32.xlu0 %v799
        %v801 = vpop.xlane.xlu0 %800
        %v802 = vrcp.pop %v798
        %v803 = vrcp.pop %v801
        %v804 = vmul.f32 %v793, %v802
        %v805 = vmul.f32 %v795, %v803
        %v806 = vpack.c.bf16 %v805, %v804
        %807 = vrot.lane.b32.xlu0 %v739, 120
        %v808 = vpop.permute.xlu0 %807
        %v811 = vsel %vm432, %v806, 0
        %813 = vmatpush.bf16.msra.mxu0 0
        %814 = vmatpush.bf16.msra.mxu0 0
        %815 = vmatpush.bf16.msra.mxu0 0
        %816 = vmatpush.bf16.msra.mxu0 0
        %817 = vmatpush.bf16.msra.mxu0 0
        %818 = vmatpush.bf16.msra.mxu0 0
        %819 = vmatpush.bf16.msra.mxu0 0
        %820 = vmatpush.bf16.msra.mxu0 %v808
        %821 = vmatmul.bf16.gmra.mxu0 %v811
        %v822 = vpop.f32.mrf.mxu0
        %v823 = vadd.f32 0.0, %v822
        %v824 = vpop.f32.mrf.mxu0
        %v825 = vadd.f32 0.0, %v824
        %826 = vdwg.mxu0
        %829 = vrot.lane.b32.xlu0 %v546, 8
        %v830 = vpop.permute.xlu0 %829
        %831 = vrot.lane.b32.xlu0 %v548, 8
        %v832 = vpop.permute.xlu0 %831
        %837 = vrot.lane.b32.xlu0 %v615, 16
        %v838 = vpop.permute.xlu0 %837
        %839 = vrot.lane.b32.xlu0 %v617, 16
        %v840 = vpop.permute.xlu0 %839
        %845 = vrot.lane.b32.xlu0 %v684, 24
        %v846 = vpop.permute.xlu0 %845
        %847 = vrot.lane.b32.xlu0 %v686, 24
        %v848 = vpop.permute.xlu0 %847
        %853 = vrot.lane.b32.xlu0 %v754, 32
        %v854 = vpop.permute.xlu0 %853
        %855 = vrot.lane.b32.xlu0 %v756, 32
        %v856 = vpop.permute.xlu0 %855
        %861 = vrot.lane.b32.xlu0 %v823, 40
        %v862 = vpop.permute.xlu0 %861
        %863 = vrot.lane.b32.xlu0 %v825, 40
        %v864 = vpop.permute.xlu0 %863
        %v867 = vsel %vm409, %v477, %v830
        %v868 = vsel %vm409, %v479, %v832
        %v869 = vsel %vm432, %v867, %v838
        %v870 = vsel %vm432, %v868, %v840
        %vm871 = vcmask 195584
        %v872 = vsel %vm871, %v869, %v846
        %v873 = vsel %vm871, %v870, %v848
        %vm874 = vcmask 261120
        %v875 = vsel %vm874, %v872, %v854
        %v876 = vsel %vm874, %v873, %v856
        %vm877 = vcmask 326656
        %v878 = vsel %vm877, %v875, %v862
        %v879 = vsel %vm877, %v876, %v864
        %s880 = scalar_lea.vmem %s224, 8
        %v881 = vld [vmem:[%s880] sm:$0xf]
        %v882 = vld [vmem:[%s880 + $0x4] sm:$0xf]
        %v883 = vunpack.c.l.bf16 %v881
        %v884 = vunpack.c.l.bf16 %v882
        %v887 = vunpack.c.l.b16 %v383
        %v888 = vunpack.c.l.b16 %v384
        %v889 = vpack.c.b16 %v888, %v887
        %v892 = vunpack.c.l.b16 %v387
        %v893 = vunpack.c.l.b16 %v388
        %v894 = vpack.c.b16 %v893, %v892
        %895 = vrot.lane.b32.xlu0 %v894, 80
        %v896 = vpop.permute.xlu0 %895
        %v898 = vsel %vm409, %v889, 0
        %v901 = vsel %vm409, %v896, 0
        %903 = vmatpush.bf16.xpose.msra.mxu0 0
        %904 = vmatpush.bf16.xpose.msra.mxu0 0
        %905 = vmatpush.bf16.xpose.msra.mxu0 0
        %906 = vmatpush.bf16.xpose.msra.mxu0 0
        %907 = vmatpush.bf16.xpose.msra.mxu0 0
        %908 = vmatpush.bf16.xpose.msra.mxu0 0
        %909 = vmatpush.bf16.xpose.msra.mxu0 0
        %910 = vmatpush.bf16.xpose.msra.mxu0 %v901
        %911 = vmatmul.bf16.gmra.mxu0 %v898
        %v912 = vpop.f32.mrf.mxu0
        %v913 = vadd.f32 0.0, %v912
        %v914 = vpop.f32.mrf.mxu0
        %v915 = vadd.f32 0.0, %v914
        %916 = vdwg.mxu0
        %v917 = vmul.f32 %v883, %v913
        %v918 = vmul.f32 %v884, %v915
        %v919 = vsel %vm432, %v917, -inf
        %920 = vmax.xlane.f32.xlu0 %v919
        %v921 = vpop.xlane.xlu0 %920
        %v922 = vsel %vm432, %v918, -inf
        %923 = vmax.xlane.f32.xlu0 %v922
        %v924 = vpop.xlane.xlu0 %923
        %v925 = vsub.f32 %v917, %v921
        %v926 = vsub.f32 %v918, %v924
        %v927 = vmul.f32 %v925, 1.442695
        %v928 = vpow.pop %v927
        %v929 = vmul.f32 %v926, 1.442695
        %v930 = vpow.pop %v929
        %v931 = vsel %vm432, %v928, 0.0
        %932 = vadd.xlane.f32.xlu0 %v931
        %v933 = vpop.xlane.xlu0 %932
        %v934 = vsel %vm432, %v930, 0.0
        %935 = vadd.xlane.f32.xlu0 %v934
        %v936 = vpop.xlane.xlu0 %935
        %v937 = vrcp.pop %v933
        %v938 = vrcp.pop %v936
        %v939 = vmul.f32 %v928, %v937
        %v940 = vmul.f32 %v930, %v938
        %v941 = vpack.c.bf16 %v940, %v939
        %v944 = vunpack.c.l.b16 %v391
        %v945 = vunpack.c.l.b16 %v392
        %v946 = vpack.c.b16 %v945, %v944
        %947 = vrot.lane.b32.xlu0 %v946, 32
        %v948 = vpop.permute.xlu0 %947
        %v951 = vsel %vm432, %v941, 0
        %953 = vmatpush.bf16.msra.mxu0 0
        %954 = vmatpush.bf16.msra.mxu0 0
        %955 = vmatpush.bf16.msra.mxu0 0
        %956 = vmatpush.bf16.msra.mxu0 0
        %957 = vmatpush.bf16.msra.mxu0 0
        %958 = vmatpush.bf16.msra.mxu0 0
        %959 = vmatpush.bf16.msra.mxu0 0
        %960 = vmatpush.bf16.msra.mxu0 %v948
        %961 = vmatmul.bf16.gmra.mxu0 %v951
        %v962 = vpop.f32.mrf.mxu0
        %v963 = vadd.f32 0.0, %v962
        %v964 = vpop.f32.mrf.mxu0
        %v965 = vadd.f32 0.0, %v964
        %966 = vdwg.mxu0
        %967 = vrot.lane.b32.xlu0 %v889, 120
        %v968 = vpop.permute.xlu0 %967
        %969 = vrot.lane.b32.xlu0 %v894, 72
        %v970 = vpop.permute.xlu0 %969
        %v972 = vsel %vm409, %v968, 0
        %v975 = vsel %vm409, %v970, 0
        %977 = vmatpush.bf16.xpose.msra.mxu0 0
        %978 = vmatpush.bf16.xpose.msra.mxu0 0
        %979 = vmatpush.bf16.xpose.msra.mxu0 0
        %980 = vmatpush.bf16.xpose.msra.mxu0 0
        %981 = vmatpush.bf16.xpose.msra.mxu0 0
        %982 = vmatpush.bf16.xpose.msra.mxu0 0
        %983 = vmatpush.bf16.xpose.msra.mxu0 0
        %984 = vmatpush.bf16.xpose.msra.mxu0 %v975
        %985 = vmatmul.bf16.gmra.mxu0 %v972
        %v986 = vpop.f32.mrf.mxu0
        %v987 = vadd.f32 0.0, %v986
        %v988 = vpop.f32.mrf.mxu0
        %v989 = vadd.f32 0.0, %v988
        %990 = vdwg.mxu0
        %v991 = vmul.f32 %v883, %v987
        %v992 = vmul.f32 %v884, %v989
        %v993 = vsel %vm432, %v991, -inf
        %994 = vmax.xlane.f32.xlu0 %v993
        %v995 = vpop.xlane.xlu0 %994
        %v996 = vsel %vm432, %v992, -inf
        %997 = vmax.xlane.f32.xlu0 %v996
        %v998 = vpop.xlane.xlu0 %997
        %v999 = vsub.f32 %v991, %v995
        %v1000 = vsub.f32 %v992, %v998
        %v1001 = vmul.f32 %v999, 1.442695
        %v1002 = vpow.pop %v1001
        %v1003 = vmul.f32 %v1000, 1.442695
        %v1004 = vpow.pop %v1003
        %v1005 = vsel %vm432, %v1002, 0.0
        %1006 = vadd.xlane.f32.xlu0 %v1005
        %v1007 = vpop.xlane.xlu0 %1006
        %v1008 = vsel %vm432, %v1004, 0.0
        %1009 = vadd.xlane.f32.xlu0 %v1008
        %v1010 = vpop.xlane.xlu0 %1009
        %v1011 = vrcp.pop %v1007
        %v1012 = vrcp.pop %v1010
        %v1013 = vmul.f32 %v1002, %v1011
        %v1014 = vmul.f32 %v1004, %v1012
        %v1015 = vpack.c.bf16 %v1014, %v1013
        %1016 = vrot.lane.b32.xlu0 %v946, 24
        %v1017 = vpop.permute.xlu0 %1016
        %v1020 = vsel %vm432, %v1015, 0
        %1022 = vmatpush.bf16.msra.mxu0 0
        %1023 = vmatpush.bf16.msra.mxu0 0
        %1024 = vmatpush.bf16.msra.mxu0 0
        %1025 = vmatpush.bf16.msra.mxu0 0
        %1026 = vmatpush.bf16.msra.mxu0 0
        %1027 = vmatpush.bf16.msra.mxu0 0
        %1028 = vmatpush.bf16.msra.mxu0 0
        %1029 = vmatpush.bf16.msra.mxu0 %v1017
        %1030 = vmatmul.bf16.gmra.mxu0 %v1020
        %v1031 = vpop.f32.mrf.mxu0
        %v1032 = vadd.f32 0.0, %v1031
        %v1033 = vpop.f32.mrf.mxu0
        %v1034 = vadd.f32 0.0, %v1033
        %1035 = vdwg.mxu0
        %1036 = vrot.lane.b32.xlu0 %v889, 112
        %v1037 = vpop.permute.xlu0 %1036
        %1038 = vrot.lane.b32.xlu0 %v894, 64
        %v1039 = vpop.permute.xlu0 %1038
        %v1041 = vsel %vm409, %v1037, 0
        %v1044 = vsel %vm409, %v1039, 0
        %1046 = vmatpush.bf16.xpose.msra.mxu0 0
        %1047 = vmatpush.bf16.xpose.msra.mxu0 0
        %1048 = vmatpush.bf16.xpose.msra.mxu0 0
        %1049 = vmatpush.bf16.xpose.msra.mxu0 0
        %1050 = vmatpush.bf16.xpose.msra.mxu0 0
        %1051 = vmatpush.bf16.xpose.msra.mxu0 0
        %1052 = vmatpush.bf16.xpose.msra.mxu0 0
        %1053 = vmatpush.bf16.xpose.msra.mxu0 %v1044
        %1054 = vmatmul.bf16.gmra.mxu0 %v1041
        %v1055 = vpop.f32.mrf.mxu0
        %v1056 = vadd.f32 0.0, %v1055
        %v1057 = vpop.f32.mrf.mxu0
        %v1058 = vadd.f32 0.0, %v1057
        %1059 = vdwg.mxu0
        %v1060 = vmul.f32 %v883, %v1056
        %v1061 = vmul.f32 %v884, %v1058
        %v1062 = vsel %vm432, %v1060, -inf
        %1063 = vmax.xlane.f32.xlu0 %v1062
        %v1064 = vpop.xlane.xlu0 %1063
        %v1065 = vsel %vm432, %v1061, -inf
        %1066 = vmax.xlane.f32.xlu0 %v1065
        %v1067 = vpop.xlane.xlu0 %1066
        %v1068 = vsub.f32 %v1060, %v1064
        %v1069 = vsub.f32 %v1061, %v1067
        %v1070 = vmul.f32 %v1068, 1.442695
        %v1071 = vpow.pop %v1070
        %v1072 = vmul.f32 %v1069, 1.442695
        %v1073 = vpow.pop %v1072
        %v1074 = vsel %vm432, %v1071, 0.0
        %1075 = vadd.xlane.f32.xlu0 %v1074
        %v1076 = vpop.xlane.xlu0 %1075
        %v1077 = vsel %vm432, %v1073, 0.0
        %1078 = vadd.xlane.f32.xlu0 %v1077
        %v1079 = vpop.xlane.xlu0 %1078
        %v1080 = vrcp.pop %v1076
        %v1081 = vrcp.pop %v1079
        %v1082 = vmul.f32 %v1071, %v1080
        %v1083 = vmul.f32 %v1073, %v1081
        %v1084 = vpack.c.bf16 %v1083, %v1082
        %1085 = vrot.lane.b32.xlu0 %v946, 16
        %v1086 = vpop.permute.xlu0 %1085
        %v1089 = vsel %vm432, %v1084, 0
        %1091 = vmatpush.bf16.msra.mxu0 0
        %1092 = vmatpush.bf16.msra.mxu0 0
        %1093 = vmatpush.bf16.msra.mxu0 0
        %1094 = vmatpush.bf16.msra.mxu0 0
        %1095 = vmatpush.bf16.msra.mxu0 0
        %1096 = vmatpush.bf16.msra.mxu0 0
        %1097 = vmatpush.bf16.msra.mxu0 0
        %1098 = vmatpush.bf16.msra.mxu0 %v1086
        %1099 = vmatmul.bf16.gmra.mxu0 %v1089
        %v1100 = vpop.f32.mrf.mxu0
        %v1101 = vadd.f32 0.0, %v1100
        %v1102 = vpop.f32.mrf.mxu0
        %v1103 = vadd.f32 0.0, %v1102
        %1104 = vdwg.mxu0
        %1105 = vrot.lane.b32.xlu0 %v889, 104
        %v1106 = vpop.permute.xlu0 %1105
        %1107 = vrot.lane.b32.xlu0 %v894, 56
        %v1108 = vpop.permute.xlu0 %1107
        %v1110 = vsel %vm409, %v1106, 0
        %v1113 = vsel %vm409, %v1108, 0
        %1115 = vmatpush.bf16.xpose.msra.mxu0 0
        %1116 = vmatpush.bf16.xpose.msra.mxu0 0
        %1117 = vmatpush.bf16.xpose.msra.mxu0 0
        %1118 = vmatpush.bf16.xpose.msra.mxu0 0
        %1119 = vmatpush.bf16.xpose.msra.mxu0 0
        %1120 = vmatpush.bf16.xpose.msra.mxu0 0
        %1121 = vmatpush.bf16.xpose.msra.mxu0 0
        %1122 = vmatpush.bf16.xpose.msra.mxu0 %v1113
        %1123 = vmatmul.bf16.gmra.mxu0 %v1110
        %v1124 = vpop.f32.mrf.mxu0
        %v1125 = vadd.f32 0.0, %v1124
        %v1126 = vpop.f32.mrf.mxu0
        %v1127 = vadd.f32 0.0, %v1126
        %1128 = vdwg.mxu0
        %v1129 = vmul.f32 %v883, %v1125
        %v1130 = vmul.f32 %v884, %v1127
        %v1131 = vsel %vm432, %v1129, -inf
        %1132 = vmax.xlane.f32.xlu0 %v1131
        %v1133 = vpop.xlane.xlu0 %1132
        %v1134 = vsel %vm432, %v1130, -inf
        %1135 = vmax.xlane.f32.xlu0 %v1134
        %v1136 = vpop.xlane.xlu0 %1135
        %v1137 = vsub.f32 %v1129, %v1133
        %v1138 = vsub.f32 %v1130, %v1136
        %v1139 = vmul.f32 %v1137, 1.442695
        %v1140 = vpow.pop %v1139
        %v1141 = vmul.f32 %v1138, 1.442695
        %v1142 = vpow.pop %v1141
        %v1143 = vsel %vm432, %v1140, 0.0
        %1144 = vadd.xlane.f32.xlu0 %v1143
        %v1145 = vpop.xlane.xlu0 %1144
        %v1146 = vsel %vm432, %v1142, 0.0
        %1147 = vadd.xlane.f32.xlu0 %v1146
        %v1148 = vpop.xlane.xlu0 %1147
        %v1149 = vrcp.pop %v1145
        %v1150 = vrcp.pop %v1148
        %v1151 = vmul.f32 %v1140, %v1149
        %v1152 = vmul.f32 %v1142, %v1150
        %v1153 = vpack.c.bf16 %v1152, %v1151
        %1154 = vrot.lane.b32.xlu0 %v946, 8
        %v1155 = vpop.permute.xlu0 %1154
        %v1158 = vsel %vm432, %v1153, 0
        %1160 = vmatpush.bf16.msra.mxu0 0
        %1161 = vmatpush.bf16.msra.mxu0 0
        %1162 = vmatpush.bf16.msra.mxu0 0
        %1163 = vmatpush.bf16.msra.mxu0 0
        %1164 = vmatpush.bf16.msra.mxu0 0
        %1165 = vmatpush.bf16.msra.mxu0 0
        %1166 = vmatpush.bf16.msra.mxu0 0
        %1167 = vmatpush.bf16.msra.mxu0 %v1155
        %1168 = vmatmul.bf16.gmra.mxu0 %v1158
        %v1169 = vpop.f32.mrf.mxu0
        %v1170 = vadd.f32 0.0, %v1169
        %v1171 = vpop.f32.mrf.mxu0
        %v1172 = vadd.f32 0.0, %v1171
        %1173 = vdwg.mxu0
        %1174 = vrot.lane.b32.xlu0 %v889, 96
        %v1175 = vpop.permute.xlu0 %1174
        %1176 = vrot.lane.b32.xlu0 %v894, 48
        %v1177 = vpop.permute.xlu0 %1176
        %v1179 = vsel %vm409, %v1175, 0
        %v1182 = vsel %vm409, %v1177, 0
        %1184 = vmatpush.bf16.xpose.msra.mxu0 0
        %1185 = vmatpush.bf16.xpose.msra.mxu0 0
        %1186 = vmatpush.bf16.xpose.msra.mxu0 0
        %1187 = vmatpush.bf16.xpose.msra.mxu0 0
        %1188 = vmatpush.bf16.xpose.msra.mxu0 0
        %1189 = vmatpush.bf16.xpose.msra.mxu0 0
        %1190 = vmatpush.bf16.xpose.msra.mxu0 0
        %1191 = vmatpush.bf16.xpose.msra.mxu0 %v1182
        %1192 = vmatmul.bf16.gmra.mxu0 %v1179
        %v1193 = vpop.f32.mrf.mxu0
        %v1194 = vadd.f32 0.0, %v1193
        %v1195 = vpop.f32.mrf.mxu0
        %v1196 = vadd.f32 0.0, %v1195
        %1197 = vdwg.mxu0
        %v1198 = vmul.f32 %v883, %v1194
        %v1199 = vmul.f32 %v884, %v1196
        %v1200 = vsel %vm432, %v1198, -inf
        %1201 = vmax.xlane.f32.xlu0 %v1200
        %v1202 = vpop.xlane.xlu0 %1201
        %v1203 = vsel %vm432, %v1199, -inf
        %1204 = vmax.xlane.f32.xlu0 %v1203
        %v1205 = vpop.xlane.xlu0 %1204
        %v1206 = vsub.f32 %v1198, %v1202
        %v1207 = vsub.f32 %v1199, %v1205
        %v1208 = vmul.f32 %v1206, 1.442695
        %v1209 = vpow.pop %v1208
        %v1210 = vmul.f32 %v1207, 1.442695
        %v1211 = vpow.pop %v1210
        %v1212 = vsel %vm432, %v1209, 0.0
        %1213 = vadd.xlane.f32.xlu0 %v1212
        %v1214 = vpop.xlane.xlu0 %1213
        %v1215 = vsel %vm432, %v1211, 0.0
        %1216 = vadd.xlane.f32.xlu0 %v1215
        %v1217 = vpop.xlane.xlu0 %1216
        %v1218 = vrcp.pop %v1214
        %v1219 = vrcp.pop %v1217
        %v1220 = vmul.f32 %v1209, %v1218
        %v1221 = vmul.f32 %v1211, %v1219
        %v1222 = vpack.c.bf16 %v1221, %v1220
        %v1223 = vunpack.c.h.b16 %v391
        %v1224 = vunpack.c.h.b16 %v392
        %v1225 = vpack.c.b16 %v1224, %v1223
        %v1228 = vsel %vm432, %v1222, 0
        %1230 = vmatpush.bf16.msra.mxu0 0
        %1231 = vmatpush.bf16.msra.mxu0 0
        %1232 = vmatpush.bf16.msra.mxu0 0
        %1233 = vmatpush.bf16.msra.mxu0 0
        %1234 = vmatpush.bf16.msra.mxu0 0
        %1235 = vmatpush.bf16.msra.mxu0 0
        %1236 = vmatpush.bf16.msra.mxu0 0
        %1237 = vmatpush.bf16.msra.mxu0 %v1225
        %1238 = vmatmul.bf16.gmra.mxu0 %v1228
        %v1239 = vpop.f32.mrf.mxu0
        %v1240 = vadd.f32 0.0, %v1239
        %v1241 = vpop.f32.mrf.mxu0
        %v1242 = vadd.f32 0.0, %v1241
        %1243 = vdwg.mxu0
        %1244 = vrot.lane.b32.xlu0 %v889, 88
        %v1245 = vpop.permute.xlu0 %1244
        %1246 = vrot.lane.b32.xlu0 %v894, 40
        %v1247 = vpop.permute.xlu0 %1246
        %v1249 = vsel %vm409, %v1245, 0
        %v1252 = vsel %vm409, %v1247, 0
        %1254 = vmatpush.bf16.xpose.msra.mxu0 0
        %1255 = vmatpush.bf16.xpose.msra.mxu0 0
        %1256 = vmatpush.bf16.xpose.msra.mxu0 0
        %1257 = vmatpush.bf16.xpose.msra.mxu0 0
        %1258 = vmatpush.bf16.xpose.msra.mxu0 0
        %1259 = vmatpush.bf16.xpose.msra.mxu0 0
        %1260 = vmatpush.bf16.xpose.msra.mxu0 0
        %1261 = vmatpush.bf16.xpose.msra.mxu0 %v1252
        %1262 = vmatmul.bf16.gmra.mxu0 %v1249
        %v1263 = vpop.f32.mrf.mxu0
        %v1264 = vadd.f32 0.0, %v1263
        %v1265 = vpop.f32.mrf.mxu0
        %v1266 = vadd.f32 0.0, %v1265
        %1267 = vdwg.mxu0
        %v1268 = vmul.f32 %v883, %v1264
        %v1269 = vmul.f32 %v884, %v1266
        %v1270 = vsel %vm432, %v1268, -inf
        %1271 = vmax.xlane.f32.xlu0 %v1270
        %v1272 = vpop.xlane.xlu0 %1271
        %v1273 = vsel %vm432, %v1269, -inf
        %1274 = vmax.xlane.f32.xlu0 %v1273
        %v1275 = vpop.xlane.xlu0 %1274
        %v1276 = vsub.f32 %v1268, %v1272
        %v1277 = vsub.f32 %v1269, %v1275
        %v1278 = vmul.f32 %v1276, 1.442695
        %v1279 = vpow.pop %v1278
        %v1280 = vmul.f32 %v1277, 1.442695
        %v1281 = vpow.pop %v1280
        %v1282 = vsel %vm432, %v1279, 0.0
        %1283 = vadd.xlane.f32.xlu0 %v1282
        %v1284 = vpop.xlane.xlu0 %1283
        %v1285 = vsel %vm432, %v1281, 0.0
        %1286 = vadd.xlane.f32.xlu0 %v1285
        %v1287 = vpop.xlane.xlu0 %1286
        %v1288 = vrcp.pop %v1284
        %v1289 = vrcp.pop %v1287
        %v1290 = vmul.f32 %v1279, %v1288
        %v1291 = vmul.f32 %v1281, %v1289
        %v1292 = vpack.c.bf16 %v1291, %v1290
        %1293 = vrot.lane.b32.xlu0 %v1225, 120
        %v1294 = vpop.permute.xlu0 %1293
        %v1297 = vsel %vm432, %v1292, 0
        %1299 = vmatpush.bf16.msra.mxu0 0
        %1300 = vmatpush.bf16.msra.mxu0 0
        %1301 = vmatpush.bf16.msra.mxu0 0
        %1302 = vmatpush.bf16.msra.mxu0 0
        %1303 = vmatpush.bf16.msra.mxu0 0
        %1304 = vmatpush.bf16.msra.mxu0 0
        %1305 = vmatpush.bf16.msra.mxu0 0
        %1306 = vmatpush.bf16.msra.mxu0 %v1294
        %1307 = vmatmul.bf16.gmra.mxu0 %v1297
        %v1308 = vpop.f32.mrf.mxu0
        %v1309 = vadd.f32 0.0, %v1308
        %v1310 = vpop.f32.mrf.mxu0
        %v1311 = vadd.f32 0.0, %v1310
        %1312 = vdwg.mxu0
        %1315 = vrot.lane.b32.xlu0 %v1032, 8
        %v1316 = vpop.permute.xlu0 %1315
        %1317 = vrot.lane.b32.xlu0 %v1034, 8
        %v1318 = vpop.permute.xlu0 %1317
        %1323 = vrot.lane.b32.xlu0 %v1101, 16
        %v1324 = vpop.permute.xlu0 %1323
        %1325 = vrot.lane.b32.xlu0 %v1103, 16
        %v1326 = vpop.permute.xlu0 %1325
        %1331 = vrot.lane.b32.xlu0 %v1170, 24
        %v1332 = vpop.permute.xlu0 %1331
        %1333 = vrot.lane.b32.xlu0 %v1172, 24
        %v1334 = vpop.permute.xlu0 %1333
        %1339 = vrot.lane.b32.xlu0 %v1240, 32
        %v1340 = vpop.permute.xlu0 %1339
        %1341 = vrot.lane.b32.xlu0 %v1242, 32
        %v1342 = vpop.permute.xlu0 %1341
        %1347 = vrot.lane.b32.xlu0 %v1309, 40
        %v1348 = vpop.permute.xlu0 %1347
        %1349 = vrot.lane.b32.xlu0 %v1311, 40
        %v1350 = vpop.permute.xlu0 %1349
        %v1353 = vsel %vm409, %v963, %v1316
        %v1354 = vsel %vm409, %v965, %v1318
        %v1355 = vsel %vm432, %v1353, %v1324
        %v1356 = vsel %vm432, %v1354, %v1326
        %v1357 = vsel %vm871, %v1355, %v1332
        %v1358 = vsel %vm871, %v1356, %v1334
        %v1359 = vsel %vm874, %v1357, %v1340
        %v1360 = vsel %vm874, %v1358, %v1342
        %v1361 = vsel %vm877, %v1359, %v1348
        %v1362 = vsel %vm877, %v1360, %v1350
        %v1363 = vpack.c.bf16 %v879, %v878
        %v1364 = vpack.c.bf16 %v1362, %v1361
        %v1365 = vld [vmem:[%s3] sm:$0xf]
        %v1366 = vld [vmem:[%s3 + $0x4] sm:$0xf]
        %v1367 = vld [vmem:[%s3 + $0x8] sm:$0xf]
        %v1368 = vld [vmem:[%s3 + $0xc] sm:$0xf]
        %v1369 = vld [vmem:[%s3 + $0x10] sm:$0xf]
        %v1370 = vld [vmem:[%s3 + $0x14] sm:$0xf]
        %v1377 = vunpack.c.l.b16 %v1365
        %v1378 = vunpack.c.l.b16 %v1366
        %v1379 = vunpack.c.l.b16 %v1367
        %v1380 = vunpack.c.l.b16 %v1368
        %v1381 = vunpack.c.l.b16 %v1369
        %v1382 = vunpack.c.l.b16 %v1370
        %v1383 = vpack.c.b16 %v1378, %v1377
        %v1384 = vpack.c.b16 %v1380, %v1379
        %v1385 = vpack.c.b16 %v1382, %v1381
        %v1390 = vsel %vm305, %v1363, 0
        %v1393 = vsel %vm305, %v1364, 0
        %1395 = vmatpush.bf16.msra.mxu0 0
        %1396 = vmatpush.bf16.msra.mxu0 0
        %1397 = vmatpush.bf16.msra.mxu0 0
        %1398 = vmatpush.bf16.msra.mxu0 0
        %1399 = vmatpush.bf16.msra.mxu0 0
        %1400 = vmatpush.bf16.msra.mxu0 %v1385
        %1401 = vmatpush.bf16.msra.mxu0 %v1384
        %1402 = vmatpush.bf16.msra.mxu0 %v1383
        %1403 = vmatmul.bf16.gmra.mxu0 %v1390
        %v1404 = vpop.f32.mrf.mxu0
        %v1405 = vadd.f32 0.0, %v1404
        %v1406 = vpop.f32.mrf.mxu0
        %v1407 = vadd.f32 0.0, %v1406
        %1408 = vmatmul.bf16.gmra.mxu0 %v1393
        %v1409 = vpop.f32.mrf.mxu0
        %v1410 = vadd.f32 0.0, %v1409
        %v1411 = vpop.f32.mrf.mxu0
        %v1412 = vadd.f32 0.0, %v1411
        %1413 = vdwg.mxu0
        %1414 = vst [vmem:[%s211] sm:$0xff] %v1405
        %1415 = vst [vmem:[%s211 + $0x8] sm:$0xff] %v1407
        %1416 = vst [vmem:[%s211 + $0x10] sm:$0xff] %v1410
        %1417 = vst [vmem:[%s211 + $0x18] sm:$0xff] %v1412
        %s1418 = sand.u32 %s120, 1
        %s1419 = scalar_lea.sflag [#allocation3], %s1418
        %s1420 = sand.u32 %s120, 1
        %s1421 = smul.addr %s1420, 32
        %s1422 = scalar_lea.vmem [#allocation2], %s1421
        // Predicated region
        $region37: #{tpu_custom_call.1} parent=35 // pred_check
          %p1423 = pneg %p130
        $region38: #{tpu_custom_call.1} parent=35 // pred_check_branch
          %1425 = sbr.rel (%p1423) target = $region40
        $region39: #{tpu_custom_call.1} parent=35 // pred_region
          %s1426 = smul.u32 2, %s18
          %1428 = vsyncadd %s1419, 0
          %s1429 = smul.addr %s1426, 2
          %s1430 = smul.addr %s1429, 8
          %s1431 = scalar_lea.hbm %s4, %s1430
          %s1432 = sshll.u32 %s1422, 4
          %s1433 = int_to_ptr.vmem [resolvable:$true] %s1432
          %s1434 = sshll.u32 %s1431, 4
          %s1435 = int_to_ptr.hbm [resolvable:$true] %s1434
          %1440 = dma.vmem_to_hbm [thread:$0]  %s1433, 512, %s1435, %s1419, 128, 128, 8
        $region40: #{tpu_custom_call.1} parent=35 // pred_fallthru
          _
      $region36: #{tpu_custom_call.1} parent=5 // pred_fallthru
        _
      %p1441 = scmp.le.s32.totalorder 2, %s13
      // Predicated region
      $region41: #{tpu_custom_call.1} parent=5 // pred_check
        %p1442 = pneg %p1441
      $region42: #{tpu_custom_call.1} parent=5 // pred_check_branch
        %1444 = sbr.rel (%p1442) target = $region44
      $region43: #{tpu_custom_call.1} parent=5 // pred_region
        %s1445 = ssub.s32 %s13, 2
        // Predicated region
        $region45: #{tpu_custom_call.1} parent=43 // pred_check
          %p1446 = pneg %p136
        $region46: #{tpu_custom_call.1} parent=43 // pred_check_branch
          %1448 = sbr.rel (%p1446) target = $region48
        $region47: #{tpu_custom_call.1} parent=43 // pred_region
          %s1449 = sand.u32 %s121, 1
          %s1450 = scalar_lea.sflag [#allocation3], %s1449
          %s1451 = sand.u32 %s121, 1
          %s1452 = smul.addr %s1451, 32
          %s1453 = scalar_lea.vmem [#allocation2], %s1452
          %1455 = dma.done %s1450, 512
        $region48: #{tpu_custom_call.1} parent=43 // pred_fallthru
          _
      $region44: #{tpu_custom_call.1} parent=5 // pred_fallthru
        _
    $region6: #{tpu_custom_call.1} parent=1 // loop_footer
      %s17 = sadd.s32 1, %s13
    $region7: #{tpu_custom_call.1} parent=1 // loop_footer_branch
      %12 = sbr.rel target = $region3
    $region8: #{tpu_custom_call.1} parent=1 // loop_exit
      _
    %1456 = vsyncpa [#allocation3], 1
    %s1457 = scalar_lea.sflag [#allocation3], 1
    %1458 = vsyncpa %s1457, 1

</llo_original>
